<compile_context>
chip_gen: v7x
topology: tpu7x:2x2x1
jax: 0.10.0
libtpu: 0.0.40
codegen_flags: <defaults>
</compile_context>

<pallas_src>
import functools
import math

import jax
import jax.numpy as jnp
from jax.experimental import pallas as pl
from jax.experimental.pallas import tpu as pltpu


# ----------------------------------------------------------------------------
# VMEM budget: stay below the per-generation physical VMEM (v7x: 64 MiB / TC).
# ----------------------------------------------------------------------------
def _vmem_limit_bytes():
    try:
        cap = int(pltpu.get_tpu_info().vmem_capacity_bytes)
    except Exception:
        cap = 64 * 1024 * 1024
    return int(min(cap * 3 // 4, 96 * 1024 * 1024))


_VMEM_LIMIT = _vmem_limit_bytes()

_CH = 256
_HID = _CH // 16                       # SNRAttention hidden width
# (kernel, stride, padding) of the five ConvTranspose blocks (output_padding=1
# for the stride-2 layers is implied by the phase decomposition).
_UPCONV_CFG = ((5, 1, 2), (5, 1, 2), (5, 1, 2), (5, 2, 2), (9, 2, 4))


# ----------------------------------------------------------------------------
# Kernels
# ----------------------------------------------------------------------------
def _upconv_gdn_prelu_kernel(x_ref, gate_ref, w_ref, b_ref, gamma_ref, beta_ref,
                             alpha_ref, y_ref, sum_ref, *, S, TH):
    """One (batch, phase_y, phase_x, row_tile) grid step of a phase-decomposed
    ConvTranspose + inverse GDN + PReLU block.

    Fusions: the previous layer's SNR-attention channel gate is applied to the
    input while it is loaded (prologue), and the per-tile channel sum of the
    output is emitted as a tiny second output (epilogue) so the attention of
    THIS layer never re-reads the feature map from HBM.
    """
    _, _, Wq, Cout = y_ref.shape
    Cin = x_ref.shape[3]
    M = TH * Wq

    t = pl.program_id(3)
    row0 = pl.multiple_of(t * TH, TH)

    gate = gate_ref[...].astype(jnp.bfloat16)                  # (1, 1, Cin)

    acc = jnp.zeros((M, Cout), jnp.float32)
    for kh in range(S):
        # contiguous full-width row slab (hoisted out of the kw loop), gated in bf16
        slab = x_ref[0, pl.ds(row0 + kh, TH), :, :] * gate     # (TH, Wp, Cin) bf16
        for kw in range(S):
            patch = slab[:, kw:kw + Wq, :].reshape(M, Cin)
            acc = acc + jnp.dot(patch, w_ref[0, kh * S + kw],
                                preferred_element_type=jnp.float32)
    acc = acc + b_ref[...]                                     # conv bias

    # inverse GDN: y = x * sqrt(beta + x^2 @ gamma)   (gamma symmetric at init;
    # for trained CompressAI weights verify the gamma orientation.)
    z = jnp.dot((acc * acc).astype(jnp.bfloat16), gamma_ref[...],
                preferred_element_type=jnp.float32) + beta_ref[...]
    y = acc * jnp.sqrt(z)

    # PReLU, single shared slope read from SMEM
    a = alpha_ref[0, 0]
    y = jnp.where(y >= 0.0, y, a * y)

    y_ref[...] = y.reshape(TH, 1, Wq, Cout).astype(y_ref.dtype)

    # partial spatial channel-sum for this layer's fused SNR attention
    s_c = jnp.sum(y, axis=0).reshape(1, 1, 1, Cout)
    sum_ref[...] = jnp.broadcast_to(s_c, (1, 1, 8, Cout))


def _snr_gate_kernel(mean_ref, snr_ref, w1_ref, w1s_ref, b1_ref, w2_ref, b2_ref,
                     g_ref):
    """SNR-attention gate MLP: sigmoid(W2 relu(W1 [pooled, snr] + b1) + b2)."""
    h = (jnp.dot(mean_ref[...], w1_ref[...], preferred_element_type=jnp.float32)
         + snr_ref[...] * w1s_ref[...] + b1_ref[...])
    h = jnp.maximum(h, 0.0)
    s = jnp.dot(h, w2_ref[...], preferred_element_type=jnp.float32) + b2_ref[...]
    g_ref[...] = 1.0 / (1.0 + jnp.exp(-s))


def _conv_sigmoid_kernel(x_ref, gate_ref, w_ref, b_ref, o_ref, *, K, TH):
    """Final 7x7 conv (input already reflection padded, attention-5 gate applied
    in the prologue) + sigmoid.  Cout=3 is tiny; kept simple per review."""
    _, _, W, Cout = o_ref.shape
    Cin = x_ref.shape[3]
    M = TH * W

    t = pl.program_id(1)
    row0 = pl.multiple_of(t * TH, TH)
    gate = gate_ref[...].astype(jnp.bfloat16)

    acc = jnp.zeros((M, Cout), jnp.float32)
    for kh in range(K):
        slab = x_ref[0, pl.ds(row0 + kh, TH), :, :] * gate
        for kw in range(K):
            patch = slab[:, kw:kw + W, :].reshape(M, Cin)
            acc = acc + jnp.dot(patch, w_ref[kh * K + kw],
                                preferred_element_type=jnp.float32)
    acc = acc + b_ref[...]
    o_ref[...] = (1.0 / (1.0 + jnp.exp(-acc))).reshape(1, TH, W, Cout)


# ----------------------------------------------------------------------------
# Glue helpers (weight re-layout, padding, im2col, tiling choice)
# ----------------------------------------------------------------------------
def _conv_phase_weights(w_t, stride, padding):
    """ConvTranspose2d weight (Cin, Cout, K, K) -> per-phase stride-1 conv
    weights (stride^2, S*S, Cin, Cout), sub-kernel size S and the symmetric
    zero pad of the (un-dilated) input.  stride=1 reduces to the usual
    flipped-kernel conv; stride=2 is the sub-pixel decomposition."""
    Cin, Cout, K, _ = w_t.shape
    s = stride
    S = K if s == 1 else (K + 1) // 2
    pad_eff = (K - 1 - padding) if s == 1 else (S - 1) // 2
    w = jnp.transpose(w_t, (2, 3, 0, 1))                       # (K, K, Cin, Cout)
    zero = jnp.zeros((Cin, Cout), w_t.dtype)
    phases = []
    for ry in range(s):
        for rx in range(s):
            taps = []
            for j in range(S):
                ky = ry + padding + s * pad_eff - s * j
                for i in range(S):
                    kx = rx + padding + s * pad_eff - s * i
                    ok = (0 <= ky < K) and (0 <= kx < K)
                    taps.append(w[ky, kx] if ok else zero)
            phases.append(jnp.stack(taps, axis=0))              # (S*S, Cin, Cout)
    return jnp.stack(phases, axis=0), S, pad_eff


def _row_tile(Hq, Wq):
    """Largest divisor of Hq keeping the f32 accumulator vreg-friendly."""
    bound = max(8, 128 // max(Wq, 1))
    th = 1
    for d in range(1, Hq + 1):
        if Hq % d == 0 and d <= bound:
            th = d
    return th


def _im2col(x, K, pad, cpad):
    """Fold KxK taps of a small-Cin layer into the contraction dimension."""
    B, H, W, C = x.shape
    xp = jnp.pad(x, ((0, 0), (pad, pad), (pad, pad), (0, 0)))
    cols = [xp[:, j:j + H, i:i + W, :] for j in range(K) for i in range(K)]
    xc = jnp.concatenate(cols, axis=-1)                         # (B, H, W, K*K*C)
    extra = cpad - xc.shape[-1]
    if extra:
        xc = jnp.pad(xc, ((0, 0), (0, 0), (0, 0), (0, extra)))
    return xc


# ----------------------------------------------------------------------------
# pallas_call wrappers
# ----------------------------------------------------------------------------
def _upconv_block(x, gate, lay):
    """x: (B, H, W, Cin) bf16, gate: (B, Cin) f32.  Returns (y bf16, mean f32)."""
    wsub, bias = lay["w"], lay["b"]
    gamma, beta, alpha = lay["gamma"], lay["beta"], lay["alpha"]
    s, S, pad_eff = lay["stride"], lay["S"], lay["pad_eff"]

    B, H, W, Cin = x.shape
    Cout = wsub.shape[-1]
    if pad_eff:
        x = jnp.pad(x, ((0, 0), (pad_eff, pad_eff), (pad_eff, pad_eff), (0, 0)))
    Hp, Wp = H + 2 * pad_eff, W + 2 * pad_eff
    Hq, Wq = Hp - S + 1, Wp - S + 1                 # per-phase output size
    TH = _row_tile(Hq, Wq)
    T = Hq // TH
    NP = s * s
    gate3 = gate.reshape(B, 1, Cin)

    kern = functools.partial(_upconv_gdn_prelu_kernel, S=S, TH=TH)
    y4, csum = pl.pallas_call(
        kern,
        out_shape=(
            jax.ShapeDtypeStruct((B * Hq, s, Wq, s * Cout), jnp.bfloat16),
            jax.ShapeDtypeStruct((B, NP * T, 8, Cout), jnp.float32),
        ),
        grid=(B, s, s, T),
        in_specs=[
            pl.BlockSpec((1, Hp, Wp, Cin), lambda b, ry, rx, t: (b, 0, 0, 0)),
            pl.BlockSpec((1, 1, Cin), lambda b, ry, rx, t: (b, 0, 0)),
            # only one phase sub-kernel resident at a time (VMEM-friendly on v7x)
            pl.BlockSpec((1, S * S, Cin, Cout),
                         lambda b, ry, rx, t: (ry * s + rx, 0, 0, 0)),
            pl.BlockSpec((1, Cout), lambda b, ry, rx, t: (0, 0)),
            pl.BlockSpec((Cout, Cout), lambda b, ry, rx, t: (0, 0)),
            pl.BlockSpec((1, Cout), lambda b, ry, rx, t: (0, 0)),
            pl.BlockSpec((1, 1), lambda b, ry, rx, t: (0, 0),
                         memory_space=pltpu.MemorySpace.SMEM),
        ],
        out_specs=(
            pl.BlockSpec((TH, 1, Wq, Cout),
                         lambda b, ry, rx, t: (b * T + t, ry, 0, rx)),
            pl.BlockSpec((1, 1, 8, Cout),
                         lambda b, ry, rx, t: (b, (ry * s + rx) * T + t, 0, 0)),
        ),
        compiler_params=pltpu.CompilerParams(
            dimension_semantics=("parallel",) * 4,
            vmem_limit_bytes=_VMEM_LIMIT),
    )(x, gate3, wsub, bias, gamma, beta, alpha)

    # pixel-shuffle interleave of the phases: a pure (data-movement-free) reshape
    y = y4.reshape(B, Hq * s, Wq * s, Cout)
    mean = csum[:, :, 0, :].sum(axis=1) / float(Hq * s * Wq * s)
    return y, mean


def _snr_gate(mean, snr, att):
    w1, w1s, b1, w2, b2 = att
    B, C = mean.shape

    def fs(shape):
        return pl.BlockSpec(shape, lambda i: (0,) * len(shape))

    return pl.pallas_call(
        _snr_gate_kernel,
        out_shape=jax.ShapeDtypeStruct((B, C), jnp.float32),
        grid=(1,),
        in_specs=[fs(mean.shape), fs(snr.shape), fs(w1.shape), fs(w1s.shape),
                  fs(b1.shape), fs(w2.shape), fs(b2.shape)],
        out_specs=fs((B, C)),
    )(mean, snr, w1, w1s, b1, w2, b2)


def _conv_out(x, gate, out_p):
    w_kk, bias = out_p                                # (49, Cin, 3), (1, 3)
    B, H, W, Cin = x.shape
    KK, _, Cout = w_kk.shape
    K = int(round(math.sqrt(KK)))
    pad = (K - 1) // 2
    xp = jnp.pad(x, ((0, 0), (pad, pad), (pad, pad), (0, 0)), mode="reflect")
    Hp, Wp = H + 2 * pad, W + 2 * pad
    TH = _row_tile(H, W)
    T = H // TH
    gate3 = gate.reshape(B, 1, Cin)

    kern = functools.partial(_conv_sigmoid_kernel, K=K, TH=TH)
    return pl.pallas_call(
        kern,
        out_shape=jax.ShapeDtypeStruct((B, H, W, Cout), jnp.float32),
        grid=(B, T),
        in_specs=[
            pl.BlockSpec((1, Hp, Wp, Cin), lambda b, t: (b, 0, 0, 0)),
            pl.BlockSpec((1, 1, Cin), lambda b, t: (b, 0, 0)),
            pl.BlockSpec((KK, Cin, Cout), lambda b, t: (0, 0, 0)),
            pl.BlockSpec((1, Cout), lambda b, t: (0, 0)),
        ],
        out_specs=pl.BlockSpec((1, TH, W, Cout), lambda b, t: (b, t, 0, 0)),
        compiler_params=pltpu.CompilerParams(
            dimension_semantics=("parallel", "parallel"),
            vmem_limit_bytes=_VMEM_LIMIT),
    )(xp, gate3, w_kk, bias)


# ----------------------------------------------------------------------------
# Parameters (deterministic, in-script)
# ----------------------------------------------------------------------------
def init_decoder_params(key, C):
    keys = iter(jax.random.split(key, 64))
    layers = []
    cin = C
    for li, (K, stride, padding) in enumerate(_UPCONV_CFG):
        scale = 1.0 / math.sqrt(cin * K * K)
        w_t = jax.random.normal(next(keys), (cin, _CH, K, K), jnp.float32) * scale
        wsub, S, pad_eff = _conv_phase_weights(w_t, stride, padding)
        lay = dict(
            b=jnp.zeros((1, _CH), jnp.float32),
            gamma=(0.1 * jnp.eye(_CH, dtype=jnp.float32)).astype(jnp.bfloat16),
            beta=jnp.ones((1, _CH), jnp.float32),
            alpha=jnp.full((1, 1), 0.25, jnp.float32),
            stride=stride,
        )
        if li == 0:
            # Cin=16 layer: fold the 5x5 taps into the contraction (im2col) so
            # the MXU sees a (H*W, 512)x(512, 256) matmul instead of K=16.
            kk = K * K
            cfold = kk * cin
            cpad = -(-cfold // 128) * 128
            wfold = wsub.reshape(1, cfold, _CH)
            wfold = jnp.pad(wfold, ((0, 0), (0, cpad - cfold), (0, 0)))
            lay.update(w=wfold.reshape(1, 1, cpad, _CH).astype(jnp.bfloat16),
                       S=1, pad_eff=0, stride=1,
                       im2col=dict(K=K, pad=padding, cpad=cpad))
        else:
            lay.update(w=wsub.astype(jnp.bfloat16), S=S, pad_eff=pad_eff,
                       im2col=None)
        layers.append(lay)
        cin = _CH

    atts = []
    for _ in range(5):
        w1 = jax.random.normal(next(keys), (_CH, _HID), jnp.float32) / math.sqrt(_CH + 1)
        w1s = jax.random.normal(next(keys), (1, _HID), jnp.float32) / math.sqrt(_CH + 1)
        b1 = jnp.zeros((1, _HID), jnp.float32)
        w2 = jax.random.normal(next(keys), (_HID, _CH), jnp.float32) / math.sqrt(_HID)
        b2 = jnp.zeros((1, _CH), jnp.float32)
        atts.append((w1, w1s, b1, w2, b2))

    # output conv: PyTorch Conv2d weight (Cout, Cin, 7, 7) -> (49, Cin, Cout)
    wo = jax.random.normal(next(keys), (3, _CH, 7, 7), jnp.float32) / math.sqrt(_CH * 49)
    w_kk = jnp.transpose(wo, (2, 3, 1, 0)).reshape(49, _CH, 3).astype(jnp.bfloat16)
    bo = jnp.zeros((1, 3), jnp.float32)
    return layers, atts, (w_kk, bo)


# ----------------------------------------------------------------------------
# Full decoder forward
# ----------------------------------------------------------------------------
def decoder_forward(x_nchw, snr, params):
    layers, atts, out_p = params
    x = jnp.transpose(x_nchw, (0, 2, 3, 1)).astype(jnp.float32)    # NCHW -> NHWC
    B = x.shape[0]
    snr = snr.reshape(B, 1).astype(jnp.float32)

    gate = None
    for lay, att in zip(layers, atts):
        if lay["im2col"] is not None:
            c = lay["im2col"]
            x = _im2col(x, c["K"], c["pad"], c["cpad"])
        x = x.astype(jnp.bfloat16)
        if gate is None:                       # no attention before upconv_block1
            gate = jnp.ones((B, x.shape[-1]), jnp.float32)
        x, mean = _upconv_block(x, gate, lay)  # conv+GDN+PReLU (+gate prologue, +pool)
        gate = _snr_gate(mean, snr, att)       # gate is applied inside the NEXT kernel
    y = _conv_out(x, gate, out_p)              # attention-5 gate fused here
    return jnp.transpose(y, (0, 3, 1, 2))      # NHWC -> NCHW


# ----------------------------------------------------------------------------
if __name__ == "__main__":
    key = jax.random.PRNGKey(0)
    kx, kp = jax.random.split(key)

    # config.C = 16, latent spatial 8x8 -> output image 32x32
    B, C, h, w = 2, 16, 8, 8
    x = jax.random.normal(kx, (B, C, h, w), jnp.float32)
    snr = jnp.full((B, 1), 10.0, jnp.float32)

    params = init_decoder_params(kp, C)
    out = jax.block_until_ready(decoder_forward(x, snr, params))

    assert out.shape == (B, 3, 4 * h, 4 * w), out.shape
    assert bool(jnp.all(jnp.isfinite(out)))
    assert bool(jnp.all((out >= 0.0) & (out <= 1.0)))   # sigmoid output range
    print("KERNEL_OK")
</pallas_src>

<mosaic_0001>
module attributes {stable_mosaic.version = 11 : i64} {
  func.func @_upconv_gdn_prelu_kernel(%arg0: i32, %arg1: i32, %arg2: i32, %arg3: i32, %arg4: memref<1x8x8x512xbf16, #tpu.memory_space<vmem>>, %arg5: memref<1x1x512xf32, #tpu.memory_space<vmem>>, %arg6: memref<1x1x512x256xbf16, #tpu.memory_space<vmem>>, %arg7: memref<1x256xf32, #tpu.memory_space<vmem>>, %arg8: memref<256x256xbf16, #tpu.memory_space<vmem>>, %arg9: memref<1x256xf32, #tpu.memory_space<vmem>>, %arg10: memref<1x1xf32, #tpu.memory_space<smem>>, %arg11: memref<8x1x8x256xbf16, #tpu.memory_space<vmem>>, %arg12: memref<1x1x8x256xf32, #tpu.memory_space<vmem>>) attributes {dimension_semantics = [#tpu.dimension_semantics<parallel>, #tpu.dimension_semantics<parallel>, #tpu.dimension_semantics<parallel>, #tpu.dimension_semantics<parallel>], iteration_bounds = array<i64: 2, 1, 1, 1>, scalar_prefetch = 0 : i64, scratch_operands = 0 : i64, tpu.core_type = #tpu.core_type<tc>, window_params = [{transform_indices = @transform_0, window_bounds = array<i64: 1, 8, 8, 512>}, {transform_indices = @transform_1, window_bounds = array<i64: 1, 1, 512>}, {transform_indices = @transform_2, window_bounds = array<i64: 1, 1, 512, 256>}, {pipeline_mode = #tpu.pipeline_mode<synchronous>, transform_indices = @transform_3, window_bounds = array<i64: 1, 256>}, {pipeline_mode = #tpu.pipeline_mode<synchronous>, transform_indices = @transform_4, window_bounds = array<i64: 256, 256>}, {pipeline_mode = #tpu.pipeline_mode<synchronous>, transform_indices = @transform_5, window_bounds = array<i64: 1, 256>}, {transform_indices = @transform_6, window_bounds = array<i64: 1, 1>}, {transform_indices = @transform_7, window_bounds = array<i64: 8, 1, 8, 256>}, {transform_indices = @transform_8, window_bounds = array<i64: 1, 1, 8, 256>}]} {
    %c8_i32 = arith.constant 8 : i32
    %0 = arith.muli %arg3, %c8_i32 : i32
    %1 = tpu.assume_multiple %0, 8 : i32
    %c0 = arith.constant 0 : index
    %c0_0 = arith.constant 0 : index
    %c0_1 = arith.constant 0 : index
    %2 = vector.load %arg5[%c0, %c0_0, %c0_1] : memref<1x1x512xf32, #tpu.memory_space<vmem>>, vector<1x1x512xf32>
    %3 = arith.truncf %2 : vector<1x1x512xf32> to vector<1x1x512xbf16>
    %cst = arith.constant 0.000000e+00 : f32
    %4 = vector.broadcast %cst : f32 to vector<64x256xf32>
    %c0_i32 = arith.constant 0 : i32
    %5 = arith.addi %1, %c0_i32 : i32
    %c0_2 = arith.constant 0 : index
    %6 = arith.index_cast %5 : i32 to index
    %c0_3 = arith.constant 0 : index
    %c0_4 = arith.constant 0 : index
    %7 = vector.load %arg4[%c0_2, %6, %c0_3, %c0_4] : memref<1x8x8x512xbf16, #tpu.memory_space<vmem>>, vector<1x8x8x512xbf16>
    %8 = vector.shape_cast %7 : vector<1x8x8x512xbf16> to vector<8x8x512xbf16>
    %9 = vector.broadcast %3 : vector<1x1x512xbf16> to vector<8x8x512xbf16>
    %10 = arith.mulf %8, %9 : vector<8x8x512xbf16>
    %11 = vector.shape_cast %10 : vector<8x8x512xbf16> to vector<64x512xbf16>
    %c0_5 = arith.constant 0 : index
    %c0_6 = arith.constant 0 : index
    %c0_7 = arith.constant 0 : index
    %c0_8 = arith.constant 0 : index
    %12 = vector.load %arg6[%c0_5, %c0_6, %c0_7, %c0_8] : memref<1x1x512x256xbf16, #tpu.memory_space<vmem>>, vector<1x1x512x256xbf16>
    %13 = vector.shape_cast %12 : vector<1x1x512x256xbf16> to vector<512x256xbf16>
    %cst_9 = arith.constant dense<0.000000e+00> : vector<64x256xf32>
    %14 = tpu.matmul %11, %13, %cst_9 {dimension_numbers = #tpu.dot_dimension_numbers<[1], [0], [0], [1], [0, 0, 1, 1], [], []>} : vector<64x512xbf16>, vector<512x256xbf16>, vector<64x256xf32> -> vector<64x256xf32>
    %15 = arith.addf %4, %14 : vector<64x256xf32>
    %c0_10 = arith.constant 0 : index
    %c0_11 = arith.constant 0 : index
    %16 = vector.load %arg7[%c0_10, %c0_11] : memref<1x256xf32, #tpu.memory_space<vmem>>, vector<1x256xf32>
    %17 = vector.broadcast %16 : vector<1x256xf32> to vector<64x256xf32>
    %18 = arith.addf %15, %17 : vector<64x256xf32>
    %19 = arith.mulf %18, %18 : vector<64x256xf32>
    %20 = arith.truncf %19 : vector<64x256xf32> to vector<64x256xbf16>
    %c0_12 = arith.constant 0 : index
    %c0_13 = arith.constant 0 : index
    %21 = vector.load %arg8[%c0_12, %c0_13] : memref<256x256xbf16, #tpu.memory_space<vmem>>, vector<256x256xbf16>
    %cst_14 = arith.constant dense<0.000000e+00> : vector<64x256xf32>
    %22 = tpu.matmul %20, %21, %cst_14 {dimension_numbers = #tpu.dot_dimension_numbers<[1], [0], [0], [1], [0, 0, 1, 1], [], []>} : vector<64x256xbf16>, vector<256x256xbf16>, vector<64x256xf32> -> vector<64x256xf32>
    %c0_15 = arith.constant 0 : index
    %c0_16 = arith.constant 0 : index
    %23 = vector.load %arg9[%c0_15, %c0_16] : memref<1x256xf32, #tpu.memory_space<vmem>>, vector<1x256xf32>
    %24 = vector.broadcast %23 : vector<1x256xf32> to vector<64x256xf32>
    %25 = arith.addf %22, %24 : vector<64x256xf32>
    %26 = math.sqrt %25 : vector<64x256xf32>
    %27 = arith.mulf %18, %26 : vector<64x256xf32>
    %c0_17 = arith.constant 0 : index
    %c0_18 = arith.constant 0 : index
    %28 = memref.load %arg10[%c0_17, %c0_18] : memref<1x1xf32, #tpu.memory_space<smem>>
    %cst_19 = arith.constant 0.000000e+00 : f32
    %29 = vector.broadcast %cst_19 : f32 to vector<64x256xf32>
    %30 = arith.cmpf oge, %27, %29 : vector<64x256xf32>
    %31 = vector.broadcast %28 : f32 to vector<64x256xf32>
    %32 = arith.mulf %31, %27 : vector<64x256xf32>
    %33 = arith.select %30, %27, %32 : vector<64x256xi1>, vector<64x256xf32>
    %34 = vector.shape_cast %33 : vector<64x256xf32> to vector<8x1x8x256xf32>
    %35 = arith.truncf %34 : vector<8x1x8x256xf32> to vector<8x1x8x256xbf16>
    %c0_20 = arith.constant 0 : index
    %c0_21 = arith.constant 0 : index
    %c0_22 = arith.constant 0 : index
    %c0_23 = arith.constant 0 : index
    %36 = vector.load %arg11[%c0_20, %c0_21, %c0_22, %c0_23] : memref<8x1x8x256xbf16, #tpu.memory_space<vmem>>, vector<8x1x8x256xbf16>
    tpu.vector_store %arg11[%c0_20, %c0_21, %c0_22, %c0_23], %35 {strides = array<i32>} : memref<8x1x8x256xbf16, #tpu.memory_space<vmem>>, vector<8x1x8x256xbf16>,
    %cst_24 = arith.constant dense<0.000000e+00> : vector<256xf32>
    %37 = vector.multi_reduction <add>, %33, %cst_24 [0] : vector<64x256xf32> to vector<256xf32>
    %38 = vector.shape_cast %37 : vector<256xf32> to vector<1x1x1x256xf32>
    %39 = vector.shape_cast %38 : vector<1x1x1x256xf32> to vector<1x1x1x256xf32>
    %40 = vector.broadcast %39 : vector<1x1x1x256xf32> to vector<1x1x8x256xf32>
    %c0_25 = arith.constant 0 : index
    %c0_26 = arith.constant 0 : index
    %c0_27 = arith.constant 0 : index
    %c0_28 = arith.constant 0 : index
    %41 = vector.load %arg12[%c0_25, %c0_26, %c0_27, %c0_28] : memref<1x1x8x256xf32, #tpu.memory_space<vmem>>, vector<1x1x8x256xf32>
    tpu.vector_store %arg12[%c0_25, %c0_26, %c0_27, %c0_28], %40 {strides = array<i32>} : memref<1x1x8x256xf32, #tpu.memory_space<vmem>>, vector<1x1x8x256xf32>,
    return
  }
  func.func @transform_0(%arg0: i32, %arg1: i32, %arg2: i32, %arg3: i32) -> (i32, i32, i32, i32) {
    %c0_i32 = arith.constant 0 : i32
    %c0_i32_0 = arith.constant 0 : i32
    %c0_i32_1 = arith.constant 0 : i32
    %c0_i32_2 = arith.constant 0 : i32
    return %arg0, %c0_i32, %c0_i32_0, %c0_i32_1 : i32, i32, i32, i32
  }
  func.func @transform_1(%arg0: i32, %arg1: i32, %arg2: i32, %arg3: i32) -> (i32, i32, i32) {
    %c0_i32 = arith.constant 0 : i32
    %c0_i32_0 = arith.constant 0 : i32
    %c0_i32_1 = arith.constant 0 : i32
    return %arg0, %c0_i32, %c0_i32_0 : i32, i32, i32
  }
  func.func @transform_2(%arg0: i32, %arg1: i32, %arg2: i32, %arg3: i32) -> (i32, i32, i32, i32) {
    %c1_i32 = arith.constant 1 : i32
    %0 = arith.muli %arg1, %c1_i32 : i32
    %1 = arith.addi %0, %arg2 : i32
    %c0_i32 = arith.constant 0 : i32
    %c0_i32_0 = arith.constant 0 : i32
    %c0_i32_1 = arith.constant 0 : i32
    %c0_i32_2 = arith.constant 0 : i32
    return %1, %c0_i32, %c0_i32_0, %c0_i32_1 : i32, i32, i32, i32
  }
  func.func @transform_3(%arg0: i32, %arg1: i32, %arg2: i32, %arg3: i32) -> (i32, i32) {
    %c0_i32 = arith.constant 0 : i32
    %c0_i32_0 = arith.constant 0 : i32
    %c0_i32_1 = arith.constant 0 : i32
    return %c0_i32, %c0_i32_0 : i32, i32
  }
  func.func @transform_4(%arg0: i32, %arg1: i32, %arg2: i32, %arg3: i32) -> (i32, i32) {
    %c0_i32 = arith.constant 0 : i32
    %c0_i32_0 = arith.constant 0 : i32
    %c0_i32_1 = arith.constant 0 : i32
    return %c0_i32, %c0_i32_0 : i32, i32
  }
  func.func @transform_5(%arg0: i32, %arg1: i32, %arg2: i32, %arg3: i32) -> (i32, i32) {
    %c0_i32 = arith.constant 0 : i32
    %c0_i32_0 = arith.constant 0 : i32
    %c0_i32_1 = arith.constant 0 : i32
    return %c0_i32, %c0_i32_0 : i32, i32
  }
  func.func @transform_6(%arg0: i32, %arg1: i32, %arg2: i32, %arg3: i32) -> (i32, i32) {
    %c0_i32 = arith.constant 0 : i32
    %c0_i32_0 = arith.constant 0 : i32
    %c0_i32_1 = arith.constant 0 : i32
    return %c0_i32, %c0_i32_0 : i32, i32
  }
  func.func @transform_7(%arg0: i32, %arg1: i32, %arg2: i32, %arg3: i32) -> (i32, i32, i32, i32) {
    %c1_i32 = arith.constant 1 : i32
    %0 = arith.muli %arg0, %c1_i32 : i32
    %1 = arith.addi %0, %arg3 : i32
    %c0_i32 = arith.constant 0 : i32
    %c0_i32_0 = arith.constant 0 : i32
    return %1, %arg1, %c0_i32, %arg2 : i32, i32, i32, i32
  }
  func.func @transform_8(%arg0: i32, %arg1: i32, %arg2: i32, %arg3: i32) -> (i32, i32, i32, i32) {
    %c1_i32 = arith.constant 1 : i32
    %0 = arith.muli %arg1, %c1_i32 : i32
    %1 = arith.addi %0, %arg2 : i32
    %c1_i32_0 = arith.constant 1 : i32
    %2 = arith.muli %1, %c1_i32_0 : i32
    %3 = arith.addi %2, %arg3 : i32
    %c0_i32 = arith.constant 0 : i32
    %c0_i32_1 = arith.constant 0 : i32
    %c0_i32_2 = arith.constant 0 : i32
    return %arg0, %3, %c0_i32, %c0_i32_1 : i32, i32, i32, i32
  }
}

</mosaic_0001>

<llo_original>
// kernel: tpu_custom_call.1
$region0: #{tpu_custom_call.1}
  #allocation0 [shape = 'u32[]', space=smem, size = 0x4, offset = 0x4, fixed_abs, tag = 'smem constant byte address 0x4 - core index']
  #allocation1 [shape = 'u32[144,128]{1,0:T(1,128)}', space=vmem, size = 0x12000, scoped, tag = 'internal scratch']
  #allocation2 [shape = 'f32[1,1]{1,0:T(1,128)S(6)}', space=smem, size = 0x200, scoped, tag = 'scoped memory for tpu_custom_call.1']
  %s0 = inlined_call_operand.hbm [shape: bf16[2,8,8,512], index: 0, kind: input, shape index: {}]
  %s1 = inlined_call_operand.hbm [shape: f32[2,1,512], index: 1, kind: input, shape index: {}]
  %s2 = inlined_call_operand.hbm [shape: bf16[1,1,512,256], index: 2, kind: input, shape index: {}]
  %s3 = inlined_call_operand.vmem [shape: f32[1,256], index: 3, kind: input, shape index: {}]
  %s4 = inlined_call_operand.hbm [shape: bf16[256,256], index: 4, kind: input, shape index: {}]
  %s5 = inlined_call_operand.vmem [shape: f32[1,256], index: 5, kind: input, shape index: {}]
  %s6 = inlined_call_operand.<no memory space> [shape: f32[1,1], index: 6, kind: input, shape index: {}]
  %s7 = inlined_call_operand.hbm [shape: bf16[16,1,8,256], index: 7, kind: output, shape index: {0}]
  %s8 = inlined_call_operand.hbm [shape: f32[2,1,8,256], index: 8, kind: output, shape index: {1}]
  %9 = xla_tuple %s7, %s8
  %s10 = sld [smem:[#allocation0]]
  $region85: #{tpu_custom_call.1} parent=0
    _
  %s12 = ssub.s32 1, %s10
  %s13 = scalar_select 0, %s12, %s10
  %14 = sst [smem:[#allocation2]] %s6
  $region1: #{tpu_custom_call.1} parent=0
    #allocation3 [shape = 'u8[131072]{0}', space=vmem, size = 0x20000, scoped, tag = 'input window, operand 0']
    #allocation4 [shape = 's32[2]{0}', space=sflag, size = 0x8, scoped, tag = 'scoped memory for tpu_custom_call.1']
    #allocation5 [shape = 's32[2]{0}', space=sflag, size = 0x8, scoped, tag = 'scoped memory for tpu_custom_call.1']
    #allocation6 [shape = 'u8[4096]{0}', space=vmem, size = 0x1000, scoped, tag = 'input window, operand 1']
    #allocation7 [shape = 's32[2]{0}', space=sflag, size = 0x8, scoped, tag = 'scoped memory for tpu_custom_call.1']
    #allocation8 [shape = 'u8[262144]{0}', space=vmem, size = 0x40000, scoped, tag = 'input window, operand 2, single buffered']
    #allocation9 [shape = 'u8[131072]{0}', space=vmem, size = 0x20000, scoped, tag = 'input window, operand 4, single buffered']
    #allocation10 [shape = 's32[1]{0}', space=sflag, size = 0x4, scoped, tag = 'scoped memory for tpu_custom_call.1']
    #allocation11 [shape = 'u8[65536]{0}', space=vmem, size = 0x10000, scoped, tag = 'output window, operand 0']
    #allocation12 [shape = 'u8[16384]{0}', space=vmem, size = 0x4000, scoped, tag = 'output window, operand 1']
    #allocation13 [shape = 's32[2]{0}', space=sflag, size = 0x8, scoped, tag = 'scoped memory for tpu_custom_call.1']
    %15 = vsyncpa [#allocation4], 0
    %s16 = scalar_lea.sflag [#allocation4], 1
    %17 = vsyncpa %s16, 0
    %18 = vsyncpa [#allocation7], 0
    %s19 = scalar_lea.sflag [#allocation7], 1
    %20 = vsyncpa %s19, 0
    %21 = vsyncpa [#allocation10], 0
    %22 = vsyncpa [#allocation5], 0
    %s23 = scalar_lea.sflag [#allocation5], 1
    %24 = vsyncpa %s23, 0
    %25 = vsyncpa [#allocation13], 0
    %s26 = scalar_lea.sflag [#allocation13], 1
    %27 = vsyncpa %s26, 0
    loop: start=0, step=1, limit=4
    $region2: #{tpu_custom_call.1} parent=1 // loop_pre_header
      _
    $region3: #{tpu_custom_call.1} parent=1 // loop_header
      %s29 = sphi 0, %s33
      %p30 = scmp.ge.s32.totalorder %s29, 4
      %s36 = sphi 0, %s62
      %s37 = sphi 0, %s58
      %s38 = sphi 0, %s54
      %s39 = sphi 0, %s50
      %s40 = sphi 0, %s36
      %s41 = sphi 0, %s37
      %s42 = sphi 0, %s38
      %s43 = sphi 0, %s39
      %s44 = sphi 0, %s40
      %s45 = sphi 0, %s41
      %s46 = sphi 0, %s42
      %s47 = sphi 0, %s43
      %s65 = sphi 0, %s67
      %s68 = sphi 0, %s65
      %s69 = sphi 0, %s68
      %s85 = sphi 0, %s69
      %s91 = sphi 0, %s93
      %s94 = sphi 0, %s91
      %s95 = sphi 0, %s94
      %s111 = sphi 0, %s95
      %s119 = sphi 0, %s121
      %s122 = sphi 0, %s119
      %s123 = sphi 0, %s122
      %s139 = sphi 0, %s123
      %s143 = sphi 0, %s143
      %s145 = sphi 0, %s143
      %s146 = sphi 0, %s145
      %s160 = sphi 0, %s146
      %s164 = sphi 0, %s164
      %s166 = sphi 0, %s164
      %s167 = sphi 0, %s166
      %s181 = sphi 0, %s167
      %s185 = sphi 0, %s185
      %s187 = sphi 0, %s185
      %s188 = sphi 0, %s187
      %s202 = sphi 0, %s188
      %s206 = sphi 0, %s206
      %s208 = sphi 0, %s206
      %s209 = sphi 0, %s208
      %s223 = sphi 0, %s209
      %s235 = sphi 0, %s237
      %s238 = sphi 0, %s235
      %s239 = sphi 0, %s238
      %s255 = sphi 0, %s239
      %s267 = sphi 0, %s269
      %s270 = sphi 0, %s267
      %s271 = sphi 0, %s270
      %s287 = sphi 0, %s271
    $region4: #{tpu_custom_call.1} parent=1 // loop_header_branch
      %32 = sbr.rel (%p30) target = $region8
    $region5: #{tpu_custom_call.1} parent=1 // loop_body
      %s34 = ssub.s32 %s29, 1
      %s35 = ssub.s32 %s29, 2
      %s48 = sadd.s32 1, %s39
      %p49 = scmp.ge.s32.totalorder %s48, 1
      %s50 = scalar_select %p49, 0, %s48
      %s51 = sadd.s32 1, %s38
      %s52 = scalar_select %p49, %s51, %s38
      %p53 = scmp.ge.s32.totalorder %s52, 1
      %s54 = scalar_select %p53, 0, %s52
      %s55 = sadd.s32 1, %s37
      %s56 = scalar_select %p53, %s55, %s37
      %p57 = scmp.ge.s32.totalorder %s56, 1
      %s58 = scalar_select %p57, 0, %s56
      %s59 = sadd.s32 1, %s36
      %s60 = scalar_select %p57, %s59, %s36
      %p61 = scmp.ge.s32.totalorder %s60, 2
      %s62 = scalar_select %p61, 0, %s60
      %s63 = ssub.s32 %s36, %s62
      %p64 = scmp.eq.s32.totalorder %s63, 0
      %s66 = sadd.s32 %s65, 1
      %s67 = scalar_select %p64, %s65, %s66
      %p70 = pneg %p64
      %p71 = scmp.eq.s32.totalorder %s29, 1
      %p72 = por %p70, %p71
      %p73 = scmp.ne.s32.totalorder %s65, %s68
      %p74 = scmp.eq.s32.totalorder %s29, 0
      %p75 = por %p73, %p74
      %p76 = scmp.ne.s32.totalorder %s65, %s68
      %p77 = scmp.eq.s32.totalorder %s34, 1
      %p78 = por %p76, %p77
      %p79 = scmp.ne.s32.totalorder %s68, %s69
      %p80 = scmp.eq.s32.totalorder %s34, 0
      %p81 = por %p79, %p80
      %p82 = scmp.ne.s32.totalorder %s68, %s69
      %p83 = scmp.eq.s32.totalorder %s35, 1
      %p84 = por %p82, %p83
      %p86 = scmp.ne.s32.totalorder %s69, %s85
      %p87 = scmp.eq.s32.totalorder %s35, 0
      %p88 = por %p86, %p87
      %s89 = ssub.s32 %s36, %s62
      %p90 = scmp.eq.s32.totalorder %s89, 0
      %s92 = sadd.s32 %s91, 1
      %s93 = scalar_select %p90, %s91, %s92
      %p96 = pneg %p90
      %p97 = scmp.eq.s32.totalorder %s29, 1
      %p98 = por %p96, %p97
      %p99 = scmp.ne.s32.totalorder %s91, %s94
      %p100 = scmp.eq.s32.totalorder %s29, 0
      %p101 = por %p99, %p100
      %p102 = scmp.ne.s32.totalorder %s91, %s94
      %p103 = scmp.eq.s32.totalorder %s34, 1
      %p104 = por %p102, %p103
      %p105 = scmp.ne.s32.totalorder %s94, %s95
      %p106 = scmp.eq.s32.totalorder %s34, 0
      %p107 = por %p105, %p106
      %p108 = scmp.ne.s32.totalorder %s94, %s95
      %p109 = scmp.eq.s32.totalorder %s35, 1
      %p110 = por %p108, %p109
      %p112 = scmp.ne.s32.totalorder %s95, %s111
      %p113 = scmp.eq.s32.totalorder %s35, 0
      %p114 = por %p112, %p113
      %s115 = sadd.s32 %s37, %s38
      %s116 = sadd.s32 %s58, %s54
      %s117 = ssub.s32 %s115, %s116
      %p118 = scmp.eq.s32.totalorder %s117, 0
      %s120 = sadd.s32 %s119, 1
      %s121 = scalar_select %p118, %s119, %s120
      %p124 = pneg %p118
      %p125 = scmp.eq.s32.totalorder %s29, 1
      %p126 = por %p124, %p125
      %p127 = scmp.ne.s32.totalorder %s119, %s122
      %p128 = scmp.eq.s32.totalorder %s29, 0
      %p129 = por %p127, %p128
      %p130 = scmp.ne.s32.totalorder %s119, %s122
      %p131 = scmp.eq.s32.totalorder %s34, 1
      %p132 = por %p130, %p131
      %p133 = scmp.ne.s32.totalorder %s122, %s123
      %p134 = scmp.eq.s32.totalorder %s34, 0
      %p135 = por %p133, %p134
      %p136 = scmp.ne.s32.totalorder %s122, %s123
      %p137 = scmp.eq.s32.totalorder %s35, 1
      %p138 = por %p136, %p137
      %p140 = scmp.ne.s32.totalorder %s123, %s139
      %p141 = scmp.eq.s32.totalorder %s35, 0
      %p142 = por %p140, %p141
      %s144 = sadd.s32 %s143, 1
      %p147 = scmp.eq.s32.totalorder %s29, 1
      %p148 = scmp.ne.s32.totalorder %s143, %s145
      %p149 = scmp.eq.s32.totalorder %s29, 0
      %p150 = por %p148, %p149
      %p151 = scmp.ne.s32.totalorder %s143, %s145
      %p152 = scmp.eq.s32.totalorder %s34, 1
      %p153 = por %p151, %p152
      %p154 = scmp.ne.s32.totalorder %s145, %s146
      %p155 = scmp.eq.s32.totalorder %s34, 0
      %p156 = por %p154, %p155
      %p157 = scmp.ne.s32.totalorder %s145, %s146
      %p158 = scmp.eq.s32.totalorder %s35, 1
      %p159 = por %p157, %p158
      %p161 = scmp.ne.s32.totalorder %s146, %s160
      %p162 = scmp.eq.s32.totalorder %s35, 0
      %p163 = por %p161, %p162
      %s165 = sadd.s32 %s164, 1
      %p168 = scmp.eq.s32.totalorder %s29, 1
      %p169 = scmp.ne.s32.totalorder %s164, %s166
      %p170 = scmp.eq.s32.totalorder %s29, 0
      %p171 = por %p169, %p170
      %p172 = scmp.ne.s32.totalorder %s164, %s166
      %p173 = scmp.eq.s32.totalorder %s34, 1
      %p174 = por %p172, %p173
      %p175 = scmp.ne.s32.totalorder %s166, %s167
      %p176 = scmp.eq.s32.totalorder %s34, 0
      %p177 = por %p175, %p176
      %p178 = scmp.ne.s32.totalorder %s166, %s167
      %p179 = scmp.eq.s32.totalorder %s35, 1
      %p180 = por %p178, %p179
      %p182 = scmp.ne.s32.totalorder %s167, %s181
      %p183 = scmp.eq.s32.totalorder %s35, 0
      %p184 = por %p182, %p183
      %s186 = sadd.s32 %s185, 1
      %p189 = scmp.eq.s32.totalorder %s29, 1
      %p190 = scmp.ne.s32.totalorder %s185, %s187
      %p191 = scmp.eq.s32.totalorder %s29, 0
      %p192 = por %p190, %p191
      %p193 = scmp.ne.s32.totalorder %s185, %s187
      %p194 = scmp.eq.s32.totalorder %s34, 1
      %p195 = por %p193, %p194
      %p196 = scmp.ne.s32.totalorder %s187, %s188
      %p197 = scmp.eq.s32.totalorder %s34, 0
      %p198 = por %p196, %p197
      %p199 = scmp.ne.s32.totalorder %s187, %s188
      %p200 = scmp.eq.s32.totalorder %s35, 1
      %p201 = por %p199, %p200
      %p203 = scmp.ne.s32.totalorder %s188, %s202
      %p204 = scmp.eq.s32.totalorder %s35, 0
      %p205 = por %p203, %p204
      %s207 = sadd.s32 %s206, 1
      %p210 = scmp.eq.s32.totalorder %s29, 1
      %p211 = scmp.ne.s32.totalorder %s206, %s208
      %p212 = scmp.eq.s32.totalorder %s29, 0
      %p213 = por %p211, %p212
      %p214 = scmp.ne.s32.totalorder %s206, %s208
      %p215 = scmp.eq.s32.totalorder %s34, 1
      %p216 = por %p214, %p215
      %p217 = scmp.ne.s32.totalorder %s208, %s209
      %p218 = scmp.eq.s32.totalorder %s34, 0
      %p219 = por %p217, %p218
      %p220 = scmp.ne.s32.totalorder %s208, %s209
      %p221 = scmp.eq.s32.totalorder %s35, 1
      %p222 = por %p220, %p221
      %p224 = scmp.ne.s32.totalorder %s209, %s223
      %p225 = scmp.eq.s32.totalorder %s35, 0
      %p226 = por %p224, %p225
      %s227 = sadd.s32 %s36, %s39
      %s228 = sadd.s32 %s62, %s50
      %s229 = ssub.s32 %s227, %s228
      %s230 = ssub.s32 %s37, %s58
      %s231 = sor.u32 %s229, %s230
      %s232 = ssub.s32 %s38, %s54
      %s233 = sor.u32 %s231, %s232
      %p234 = scmp.eq.s32.totalorder %s233, 0
      %s236 = sadd.s32 %s235, 1
      %s237 = scalar_select %p234, %s235, %s236
      %p240 = pneg %p234
      %p241 = scmp.eq.s32.totalorder %s29, 1
      %p242 = por %p240, %p241
      %p243 = scmp.ne.s32.totalorder %s235, %s238
      %p244 = scmp.eq.s32.totalorder %s29, 0
      %p245 = por %p243, %p244
      %p246 = scmp.ne.s32.totalorder %s235, %s238
      %p247 = scmp.eq.s32.totalorder %s34, 1
      %p248 = por %p246, %p247
      %p249 = scmp.ne.s32.totalorder %s238, %s239
      %p250 = scmp.eq.s32.totalorder %s34, 0
      %p251 = por %p249, %p250
      %p252 = scmp.ne.s32.totalorder %s238, %s239
      %p253 = scmp.eq.s32.totalorder %s35, 1
      %p254 = por %p252, %p253
      %p256 = scmp.ne.s32.totalorder %s239, %s255
      %p257 = scmp.eq.s32.totalorder %s35, 0
      %p258 = por %p256, %p257
      %s259 = sadd.s32 %s37, %s38
      %s260 = sadd.s32 %s259, %s39
      %s261 = sadd.s32 %s58, %s54
      %s262 = sadd.s32 %s261, %s50
      %s263 = ssub.s32 %s36, %s62
      %s264 = ssub.s32 %s260, %s262
      %s265 = sor.u32 %s263, %s264
      %p266 = scmp.eq.s32.totalorder %s265, 0
      %s268 = sadd.s32 %s267, 1
      %s269 = scalar_select %p266, %s267, %s268
      %p272 = pneg %p266
      %p273 = scmp.eq.s32.totalorder %s29, 1
      %p274 = por %p272, %p273
      %p275 = scmp.ne.s32.totalorder %s267, %s270
      %p276 = scmp.eq.s32.totalorder %s29, 0
      %p277 = por %p275, %p276
      %p278 = scmp.ne.s32.totalorder %s267, %s270
      %p279 = scmp.eq.s32.totalorder %s34, 1
      %p280 = por %p278, %p279
      %p281 = scmp.ne.s32.totalorder %s270, %s271
      %p282 = scmp.eq.s32.totalorder %s34, 0
      %p283 = por %p281, %p282
      %p284 = scmp.ne.s32.totalorder %s270, %s271
      %p285 = scmp.eq.s32.totalorder %s35, 1
      %p286 = por %p284, %p285
      %p288 = scmp.ne.s32.totalorder %s271, %s287
      %p289 = scmp.eq.s32.totalorder %s35, 0
      %p290 = por %p288, %p289
      %p291 = scmp.le.s32.totalorder 1, %s29
      %p292 = scmp.lt.s32.totalorder %s29, 3
      %p293 = pnand %p291, %p292
      %p294 = pneg %p293
      // Predicated region
      $region9: #{tpu_custom_call.1} parent=5 // pred_check
        _
      $region10: #{tpu_custom_call.1} parent=5 // pred_check_branch
        %296 = sbr.rel (%p293) target = $region12
      $region11: #{tpu_custom_call.1} parent=5 // pred_region
        %s297 = ssub.s32 %s29, 1
        // Predicated region
        $region13: #{tpu_custom_call.1} parent=11 // pred_check
          %p298 = pneg %p135
        $region14: #{tpu_custom_call.1} parent=11 // pred_check_branch
          %300 = sbr.rel (%p298) target = $region16
        $region15: #{tpu_custom_call.1} parent=11 // pred_region
          %s301 = sadd.s32 %s41, %s42
          %s303 = ssub.s32 8192, 8192
          %304 = vsyncadd [#allocation7], %s303
          %s305 = smul.addr %s301, 128
          %s306 = smul.addr %s305, 64
          %s307 = scalar_lea.hbm %s2, %s306
          %s308 = sshll.u32 [#allocation8], 4
          %s309 = int_to_ptr.vmem [resolvable:$true] %s308
          %314 = dma.hbm_to_vmem [thread:$0]  %s307, 8192, %s309, [#allocation7], 128, 128, 8
        $region16: #{tpu_custom_call.1} parent=11 // pred_fallthru
          _
        // Predicated region
        $region17: #{tpu_custom_call.1} parent=11 // pred_check
          %p315 = pneg %p156
        $region18: #{tpu_custom_call.1} parent=11 // pred_check_branch
          %317 = sbr.rel (%p315) target = $region20
        $region19: #{tpu_custom_call.1} parent=11 // pred_region
          _
        $region20: #{tpu_custom_call.1} parent=11 // pred_fallthru
          _
        // Predicated region
        $region21: #{tpu_custom_call.1} parent=11 // pred_check
          %p318 = pneg %p177
        $region22: #{tpu_custom_call.1} parent=11 // pred_check_branch
          %320 = sbr.rel (%p318) target = $region24
        $region23: #{tpu_custom_call.1} parent=11 // pred_region
          %s322 = ssub.s32 4096, 4096
          %323 = vsyncadd [#allocation10], %s322
          %s324 = sshll.u32 [#allocation9], 4
          %s325 = int_to_ptr.vmem [resolvable:$true] %s324
          %330 = dma.hbm_to_vmem [thread:$0]  %s4, 4096, %s325, [#allocation10], 128, 128, 8
        $region24: #{tpu_custom_call.1} parent=11 // pred_fallthru
          _
        // Predicated region
        $region25: #{tpu_custom_call.1} parent=11 // pred_check
          %p331 = pneg %p198
        $region26: #{tpu_custom_call.1} parent=11 // pred_check_branch
          %333 = sbr.rel (%p331) target = $region28
        $region27: #{tpu_custom_call.1} parent=11 // pred_region
          _
        $region28: #{tpu_custom_call.1} parent=11 // pred_fallthru
          _
        // Predicated region
        $region29: #{tpu_custom_call.1} parent=11 // pred_check
          %p334 = pneg %p219
        $region30: #{tpu_custom_call.1} parent=11 // pred_check_branch
          %336 = sbr.rel (%p334) target = $region32
        $region31: #{tpu_custom_call.1} parent=11 // pred_region
          _
        $region32: #{tpu_custom_call.1} parent=11 // pred_fallthru
          _
      $region12: #{tpu_custom_call.1} parent=5 // pred_fallthru
        _
      %p337 = scmp.lt.s32.totalorder %s29, 2
      // Predicated region
      $region33: #{tpu_custom_call.1} parent=5 // pred_check
        %p338 = pneg %p337
      $region34: #{tpu_custom_call.1} parent=5 // pred_check_branch
        %340 = sbr.rel (%p338) target = $region36
      $region35: #{tpu_custom_call.1} parent=5 // pred_region
        // Predicated region
        $region37: #{tpu_custom_call.1} parent=35 // pred_check
          %p341 = pneg %p75
        $region38: #{tpu_custom_call.1} parent=35 // pred_check_branch
          %343 = sbr.rel (%p341) target = $region40
        $region39: #{tpu_custom_call.1} parent=35 // pred_region
          %s344 = sand.u32 %s65, 1
          %s345 = scalar_lea.sflag [#allocation4], %s344
          %s346 = sand.u32 %s65, 1
          %s347 = smul.addr %s346, 128
          %s348 = scalar_lea.vmem [#allocation3], %s347
          %s350 = ssub.s32 2048, 2048
          %351 = vsyncadd %s345, %s350
          %s352 = smul.addr %s36, 32
          %s353 = smul.addr %s352, 64
          %s354 = scalar_lea.hbm %s0, %s353
          %s355 = sshll.u32 %s348, 4
          %s356 = int_to_ptr.vmem [resolvable:$true] %s355
          %361 = dma.hbm_to_vmem [thread:$0]  %s354, 2048, %s356, %s345, 256, 256, 16
        $region40: #{tpu_custom_call.1} parent=35 // pred_fallthru
          _
        // Predicated region
        $region41: #{tpu_custom_call.1} parent=35 // pred_check
          %p362 = pneg %p101
        $region42: #{tpu_custom_call.1} parent=35 // pred_check_branch
          %364 = sbr.rel (%p362) target = $region44
        $region43: #{tpu_custom_call.1} parent=35 // pred_region
          %s365 = sand.u32 %s29, 1
          %s366 = scalar_lea.sflag [#allocation7], %s365
          %s367 = sand.u32 %s91, 1
          %s368 = smul.addr %s367, 4
          %s369 = scalar_lea.vmem [#allocation6], %s368
          %s371 = ssub.s32 64, 64
          %372 = vsyncadd %s366, %s371
          %s373 = smul.addr %s36, 4
          %s374 = smul.addr %s373, 16
          %s375 = scalar_lea.hbm %s1, %s374
          %s377 = sshll.u32 %s369, 4
          %s378 = int_to_ptr.vmem [resolvable:$true] %s377
          %380 = dma.hbm_to_vmem [thread:$0]  %s375, 64, %s378, %s366
        $region44: #{tpu_custom_call.1} parent=35 // pred_fallthru
          _
      $region36: #{tpu_custom_call.1} parent=5 // pred_fallthru
        _
      %p381 = scmp.le.s32.totalorder 1, %s29
      %p382 = scmp.lt.s32.totalorder %s29, 3
      %p383 = pnand %p381, %p382
      %p384 = pneg %p383
      // Predicated region
      $region45: #{tpu_custom_call.1} parent=5 // pred_check
        _
      $region46: #{tpu_custom_call.1} parent=5 // pred_check_branch
        %386 = sbr.rel (%p383) target = $region48
      $region47: #{tpu_custom_call.1} parent=5 // pred_region
        %s387 = ssub.s32 %s29, 1
        %s388 = sand.u32 %s68, 1
        %s389 = scalar_lea.sflag [#allocation4], %s388
        %s390 = sand.u32 %s68, 1
        %s391 = smul.addr %s390, 128
        %s392 = scalar_lea.vmem [#allocation3], %s391
        // Predicated region
        $region49: #{tpu_custom_call.1} parent=47 // pred_check
          %p393 = pneg %p81
        $region50: #{tpu_custom_call.1} parent=47 // pred_check_branch
          %395 = sbr.rel (%p393) target = $region52
        $region51: #{tpu_custom_call.1} parent=47 // pred_region
          %396 = dma.done %s389, 2048
        $region52: #{tpu_custom_call.1} parent=47 // pred_fallthru
          _
        %s397 = sand.u32 %s34, 1
        %s398 = scalar_lea.sflag [#allocation7], %s397
        %s399 = sand.u32 %s94, 1
        %s400 = smul.addr %s399, 4
        %s401 = scalar_lea.vmem [#allocation6], %s400
        // Predicated region
        $region53: #{tpu_custom_call.1} parent=47 // pred_check
          %p402 = pneg %p107
        $region54: #{tpu_custom_call.1} parent=47 // pred_check_branch
          %404 = sbr.rel (%p402) target = $region56
        $region55: #{tpu_custom_call.1} parent=47 // pred_region
          %405 = dma.done %s398, 64
        $region56: #{tpu_custom_call.1} parent=47 // pred_fallthru
          _
        // Predicated region
        $region57: #{tpu_custom_call.1} parent=47 // pred_check
          %p406 = pneg %p135
        $region58: #{tpu_custom_call.1} parent=47 // pred_check_branch
          %408 = sbr.rel (%p406) target = $region60
        $region59: #{tpu_custom_call.1} parent=47 // pred_region
          %409 = dma.done [#allocation7], 8192
        $region60: #{tpu_custom_call.1} parent=47 // pred_fallthru
          _
        // Predicated region
        $region61: #{tpu_custom_call.1} parent=47 // pred_check
          %p410 = pneg %p177
        $region62: #{tpu_custom_call.1} parent=47 // pred_check_branch
          %412 = sbr.rel (%p410) target = $region64
        $region63: #{tpu_custom_call.1} parent=47 // pred_region
          %413 = dma.done [#allocation10], 4096
        $region64: #{tpu_custom_call.1} parent=47 // pred_fallthru
          _
        %s414 = sand.u32 %s68, 1
        %s415 = scalar_lea.sflag [#allocation4], %s414
        %s416 = sand.u32 %s68, 1
        %s417 = smul.addr %s416, 128
        %s418 = scalar_lea.vmem [#allocation3], %s417
        %p419 = pneg %p81
        %p420 = pneg %p78
        %s421 = sand.u32 %s34, 1
        %s422 = scalar_lea.sflag [#allocation7], %s421
        %s423 = sand.u32 %s94, 1
        %s424 = smul.addr %s423, 4
        %s425 = scalar_lea.vmem [#allocation6], %s424
        %p426 = pneg %p107
        %p427 = pneg %p104
        %p428 = pneg %p135
        %p429 = pneg %p132
        %p430 = pneg %p156
        %p431 = pneg %p153
        %p432 = pneg %p177
        %p433 = pneg %p174
        %p434 = pneg %p198
        %p435 = pneg %p195
        %p436 = pneg %p219
        %p437 = pneg %p216
        %p438 = pneg %p251
        %p439 = pneg %p248
        %s440 = sand.u32 %s238, 1
        %s441 = scalar_lea.sflag [#allocation5], %s440
        %s442 = sand.u32 %s238, 1
        %s443 = smul.addr %s442, 64
        %s444 = scalar_lea.vmem [#allocation11], %s443
        %p445 = pneg %p283
        %p446 = pneg %p280
        %s447 = sand.u32 %s270, 1
        %s448 = scalar_lea.sflag [#allocation13], %s447
        %s449 = sand.u32 %s270, 1
        %s450 = smul.addr %s449, 16
        %s451 = scalar_lea.vmem [#allocation12], %s450
        %s452 = sadd.s32 %s41, %s42
        %s453 = sadd.s32 %s40, %s43
        %s454 = smul.u32 8, %s453
        %s455 = smul.u32 2, %s42
        %s456 = sadd.s32 %s41, %s42
        %s457 = sadd.s32 %s456, %s43
        %s458 = smul.u32 %s43, 8
        %v459 = vld [vmem:[%s401] sm:$0xf]
        %v461 = vlaneseq
        %v462 = vshrl.u32 %v461, 7
        %v463 = vsub.s32 0, %v462
        %v464 = vrot.slane %v459, %v463
        %v465 = vlaneseq
        %v466 = vshrl.u32 %v465, 7
        %v467 = vsub.s32 1, %v466
        %v468 = vrot.slane %v459, %v467
        %v469 = vlaneseq
        %v470 = vshrl.u32 %v469, 7
        %v471 = vsub.s32 2, %v470
        %v472 = vrot.slane %v459, %v471
        %v473 = vlaneseq
        %v474 = vshrl.u32 %v473, 7
        %v475 = vsub.s32 3, %v474
        %v476 = vrot.slane %v459, %v475
        %v481 = vpack.c.bf16 %v464, %v464
        %v482 = vpack.c.bf16 %v468, %v468
        %v483 = vpack.c.bf16 %v472, %v472
        %v484 = vpack.c.bf16 %v476, %v476
        %s485 = smul.u32 %s458, 4
        %s486 = smul.addr %s485, 4
        %s487 = scalar_lea.vmem %s392, %s486 [#allocation3]
        %v488 = vld [vmem:[%s487] sm:$0xff]
        %v489 = vld [vmem:[%s487 + $0x8] sm:$0xff]
        %v490 = vld [vmem:[%s487 + $0x10] sm:$0xff]
        %v491 = vld [vmem:[%s487 + $0x18] sm:$0xff]
        %v492 = vld [vmem:[%s487 + $0x20] sm:$0xff]
        %v493 = vld [vmem:[%s487 + $0x28] sm:$0xff]
        %v494 = vld [vmem:[%s487 + $0x30] sm:$0xff]
        %v495 = vld [vmem:[%s487 + $0x38] sm:$0xff]
        %v496 = vld [vmem:[%s487 + $0x40] sm:$0xff]
        %v497 = vld [vmem:[%s487 + $0x48] sm:$0xff]
        %v498 = vld [vmem:[%s487 + $0x50] sm:$0xff]
        %v499 = vld [vmem:[%s487 + $0x58] sm:$0xff]
        %v500 = vld [vmem:[%s487 + $0x60] sm:$0xff]
        %v501 = vld [vmem:[%s487 + $0x68] sm:$0xff]
        %v502 = vld [vmem:[%s487 + $0x70] sm:$0xff]
        %v503 = vld [vmem:[%s487 + $0x78] sm:$0xff]
        %v505 = vpack.i.b16 %v481, %v481
        %v507 = vlaneseq
        %v508 = vshrl.u32 %v507, 7
        %v509 = vsub.s32 0, %v508
        %v510 = vrot.slane %v505, %v509
        %v512 = vpack.i.b16 %v482, %v482
        %v514 = vlaneseq
        %v515 = vshrl.u32 %v514, 7
        %v516 = vsub.s32 0, %v515
        %v517 = vrot.slane %v512, %v516
        %v519 = vpack.i.b16 %v483, %v483
        %v521 = vlaneseq
        %v522 = vshrl.u32 %v521, 7
        %v523 = vsub.s32 0, %v522
        %v524 = vrot.slane %v519, %v523
        %v526 = vpack.i.b16 %v484, %v484
        %v528 = vlaneseq
        %v529 = vshrl.u32 %v528, 7
        %v530 = vsub.s32 0, %v529
        %v531 = vrot.slane %v526, %v530
        %v536 = vunpack.c.l.b16 %v510
        %v537 = vunpack.c.l.b16 %v517
        %v538 = vunpack.c.l.b16 %v524
        %v539 = vunpack.c.l.b16 %v531
        %v540 = vpack.c.b16 %v537, %v536
        %v541 = vpack.c.b16 %v539, %v538
        %v544 = vmul.bf16 %v488, %v540
        %v545 = vmul.bf16 %v489, %v541
        %v546 = vmul.bf16 %v490, %v540
        %v547 = vmul.bf16 %v491, %v541
        %v548 = vmul.bf16 %v492, %v540
        %v549 = vmul.bf16 %v493, %v541
        %v550 = vmul.bf16 %v494, %v540
        %v551 = vmul.bf16 %v495, %v541
        %v552 = vmul.bf16 %v496, %v540
        %v553 = vmul.bf16 %v497, %v541
        %v554 = vmul.bf16 %v498, %v540
        %v555 = vmul.bf16 %v499, %v541
        %v556 = vmul.bf16 %v500, %v540
        %v557 = vmul.bf16 %v501, %v541
        %v558 = vmul.bf16 %v502, %v540
        %v559 = vmul.bf16 %v503, %v541
        %v560 = vld [vmem:[#allocation8] sm:$0xff]
        %v561 = vld [vmem:[#allocation8 + $0x8] sm:$0xff]
        %v562 = vld [vmem:[#allocation8 + $0x10] sm:$0xff]
        %v563 = vld [vmem:[#allocation8 + $0x18] sm:$0xff]
        %v564 = vld [vmem:[#allocation8 + $0x20] sm:$0xff]
        %v565 = vld [vmem:[#allocation8 + $0x28] sm:$0xff]
        %v566 = vld [vmem:[#allocation8 + $0x30] sm:$0xff]
        %v567 = vld [vmem:[#allocation8 + $0x38] sm:$0xff]
        %v568 = vld [vmem:[#allocation8 + $0x40] sm:$0xff]
        %v569 = vld [vmem:[#allocation8 + $0x48] sm:$0xff]
        %v570 = vld [vmem:[#allocation8 + $0x50] sm:$0xff]
        %v571 = vld [vmem:[#allocation8 + $0x58] sm:$0xff]
        %v572 = vld [vmem:[#allocation8 + $0x60] sm:$0xff]
        %v573 = vld [vmem:[#allocation8 + $0x68] sm:$0xff]
        %v574 = vld [vmem:[#allocation8 + $0x70] sm:$0xff]
        %v575 = vld [vmem:[#allocation8 + $0x78] sm:$0xff]
        %v576 = vld [vmem:[#allocation8 + $0x80] sm:$0xff]
        %v577 = vld [vmem:[#allocation8 + $0x88] sm:$0xff]
        %v578 = vld [vmem:[#allocation8 + $0x90] sm:$0xff]
        %v579 = vld [vmem:[#allocation8 + $0x98] sm:$0xff]
        %v580 = vld [vmem:[#allocation8 + $0xa0] sm:$0xff]
        %v581 = vld [vmem:[#allocation8 + $0xa8] sm:$0xff]
        %v582 = vld [vmem:[#allocation8 + $0xb0] sm:$0xff]
        %v583 = vld [vmem:[#allocation8 + $0xb8] sm:$0xff]
        %v584 = vld [vmem:[#allocation8 + $0xc0] sm:$0xff]
        %v585 = vld [vmem:[#allocation8 + $0xc8] sm:$0xff]
        %v586 = vld [vmem:[#allocation8 + $0xd0] sm:$0xff]
        %v587 = vld [vmem:[#allocation8 + $0xd8] sm:$0xff]
        %v588 = vld [vmem:[#allocation8 + $0xe0] sm:$0xff]
        %v589 = vld [vmem:[#allocation8 + $0xe8] sm:$0xff]
        %v590 = vld [vmem:[#allocation8 + $0xf0] sm:$0xff]
        %v591 = vld [vmem:[#allocation8 + $0xf8] sm:$0xff]
        %v592 = vld [vmem:[#allocation8 + $0x100] sm:$0xff]
        %v593 = vld [vmem:[#allocation8 + $0x108] sm:$0xff]
        %v594 = vld [vmem:[#allocation8 + $0x110] sm:$0xff]
        %v595 = vld [vmem:[#allocation8 + $0x118] sm:$0xff]
        %v596 = vld [vmem:[#allocation8 + $0x120] sm:$0xff]
        %v597 = vld [vmem:[#allocation8 + $0x128] sm:$0xff]
        %v598 = vld [vmem:[#allocation8 + $0x130] sm:$0xff]
        %v599 = vld [vmem:[#allocation8 + $0x138] sm:$0xff]
        %v600 = vld [vmem:[#allocation8 + $0x140] sm:$0xff]
        %v601 = vld [vmem:[#allocation8 + $0x148] sm:$0xff]
        %v602 = vld [vmem:[#allocation8 + $0x150] sm:$0xff]
        %v603 = vld [vmem:[#allocation8 + $0x158] sm:$0xff]
        %v604 = vld [vmem:[#allocation8 + $0x160] sm:$0xff]
        %v605 = vld [vmem:[#allocation8 + $0x168] sm:$0xff]
        %v606 = vld [vmem:[#allocation8 + $0x170] sm:$0xff]
        %v607 = vld [vmem:[#allocation8 + $0x178] sm:$0xff]
        %v608 = vld [vmem:[#allocation8 + $0x180] sm:$0xff]
        %v609 = vld [vmem:[#allocation8 + $0x188] sm:$0xff]
        %v610 = vld [vmem:[#allocation8 + $0x190] sm:$0xff]
        %v611 = vld [vmem:[#allocation8 + $0x198] sm:$0xff]
        %v612 = vld [vmem:[#allocation8 + $0x1a0] sm:$0xff]
        %v613 = vld [vmem:[#allocation8 + $0x1a8] sm:$0xff]
        %v614 = vld [vmem:[#allocation8 + $0x1b0] sm:$0xff]
        %v615 = vld [vmem:[#allocation8 + $0x1b8] sm:$0xff]
        %v616 = vld [vmem:[#allocation8 + $0x1c0] sm:$0xff]
        %v617 = vld [vmem:[#allocation8 + $0x1c8] sm:$0xff]
        %v618 = vld [vmem:[#allocation8 + $0x1d0] sm:$0xff]
        %v619 = vld [vmem:[#allocation8 + $0x1d8] sm:$0xff]
        %v620 = vld [vmem:[#allocation8 + $0x1e0] sm:$0xff]
        %v621 = vld [vmem:[#allocation8 + $0x1e8] sm:$0xff]
        %v622 = vld [vmem:[#allocation8 + $0x1f0] sm:$0xff]
        %v623 = vld [vmem:[#allocation8 + $0x1f8] sm:$0xff]
        %v624 = vld [vmem:[%s3] sm:$0x3]
        %v626 = vlaneseq
        %v627 = vshrl.u32 %v626, 7
        %v628 = vsub.s32 0, %v627
        %v629 = vrot.slane %v624, %v628
        %v630 = vlaneseq
        %v631 = vshrl.u32 %v630, 7
        %v632 = vsub.s32 1, %v631
        %v633 = vrot.slane %v624, %v632
        %v652 = vunpack.c.l.b16 %v544
        %v653 = vunpack.c.h.b16 %v544
        %v654 = vunpack.c.l.b16 %v545
        %v655 = vunpack.c.h.b16 %v545
        %v656 = vunpack.c.l.b16 %v546
        %v657 = vunpack.c.h.b16 %v546
        %v658 = vunpack.c.l.b16 %v547
        %v659 = vunpack.c.h.b16 %v547
        %v660 = vunpack.c.l.b16 %v548
        %v661 = vunpack.c.h.b16 %v548
        %v662 = vunpack.c.l.b16 %v549
        %v663 = vunpack.c.h.b16 %v549
        %v664 = vunpack.c.l.b16 %v550
        %v665 = vunpack.c.h.b16 %v550
        %v666 = vunpack.c.l.b16 %v551
        %v667 = vunpack.c.h.b16 %v551
        %v668 = vunpack.c.l.b16 %v552
        %v669 = vunpack.c.h.b16 %v552
        %v670 = vunpack.c.l.b16 %v553
        %v671 = vunpack.c.h.b16 %v553
        %v672 = vunpack.c.l.b16 %v554
        %v673 = vunpack.c.h.b16 %v554
        %v674 = vunpack.c.l.b16 %v555
        %v675 = vunpack.c.h.b16 %v555
        %v676 = vunpack.c.l.b16 %v556
        %v677 = vunpack.c.h.b16 %v556
        %v678 = vunpack.c.l.b16 %v557
        %v679 = vunpack.c.h.b16 %v557
        %v680 = vunpack.c.l.b16 %v558
        %v681 = vunpack.c.h.b16 %v558
        %v682 = vunpack.c.l.b16 %v559
        %v683 = vunpack.c.h.b16 %v559
        %v684 = vpack.c.b16 %v656, %v652
        %v685 = vpack.c.b16 %v657, %v653
        %v686 = vpack.c.b16 %v658, %v654
        %v687 = vpack.c.b16 %v659, %v655
        %v688 = vpack.c.b16 %v664, %v660
        %v689 = vpack.c.b16 %v665, %v661
        %v690 = vpack.c.b16 %v666, %v662
        %v691 = vpack.c.b16 %v667, %v663
        %v692 = vpack.c.b16 %v672, %v668
        %v693 = vpack.c.b16 %v673, %v669
        %v694 = vpack.c.b16 %v674, %v670
        %v695 = vpack.c.b16 %v675, %v671
        %v696 = vpack.c.b16 %v680, %v676
        %v697 = vpack.c.b16 %v681, %v677
        %v698 = vpack.c.b16 %v682, %v678
        %v699 = vpack.c.b16 %v683, %v679
        %v780 = vunpack.c.l.b16 %v560
        %v781 = vunpack.c.h.b16 %v560
        %v782 = vunpack.c.l.b16 %v561
        %v783 = vunpack.c.h.b16 %v561
        %v784 = vunpack.c.l.b16 %v562
        %v785 = vunpack.c.h.b16 %v562
        %v786 = vunpack.c.l.b16 %v563
        %v787 = vunpack.c.h.b16 %v563
        %v788 = vunpack.c.l.b16 %v564
        %v789 = vunpack.c.h.b16 %v564
        %v790 = vunpack.c.l.b16 %v565
        %v791 = vunpack.c.h.b16 %v565
        %v792 = vunpack.c.l.b16 %v566
        %v793 = vunpack.c.h.b16 %v566
        %v794 = vunpack.c.l.b16 %v567
        %v795 = vunpack.c.h.b16 %v567
        %v796 = vunpack.c.l.b16 %v568
        %v797 = vunpack.c.h.b16 %v568
        %v798 = vunpack.c.l.b16 %v569
        %v799 = vunpack.c.h.b16 %v569
        %v800 = vunpack.c.l.b16 %v570
        %v801 = vunpack.c.h.b16 %v570
        %v802 = vunpack.c.l.b16 %v571
        %v803 = vunpack.c.h.b16 %v571
        %v804 = vunpack.c.l.b16 %v572
        %v805 = vunpack.c.h.b16 %v572
        %v806 = vunpack.c.l.b16 %v573
        %v807 = vunpack.c.h.b16 %v573
        %v808 = vunpack.c.l.b16 %v574
        %v809 = vunpack.c.h.b16 %v574
        %v810 = vunpack.c.l.b16 %v575
        %v811 = vunpack.c.h.b16 %v575
        %v812 = vunpack.c.l.b16 %v576
        %v813 = vunpack.c.h.b16 %v576
        %v814 = vunpack.c.l.b16 %v577
        %v815 = vunpack.c.h.b16 %v577
        %v816 = vunpack.c.l.b16 %v578
        %v817 = vunpack.c.h.b16 %v578
        %v818 = vunpack.c.l.b16 %v579
        %v819 = vunpack.c.h.b16 %v579
        %v820 = vunpack.c.l.b16 %v580
        %v821 = vunpack.c.h.b16 %v580
        %v822 = vunpack.c.l.b16 %v581
        %v823 = vunpack.c.h.b16 %v581
        %v824 = vunpack.c.l.b16 %v582
        %v825 = vunpack.c.h.b16 %v582
        %v826 = vunpack.c.l.b16 %v583
        %v827 = vunpack.c.h.b16 %v583
        %v828 = vunpack.c.l.b16 %v584
        %v829 = vunpack.c.h.b16 %v584
        %v830 = vunpack.c.l.b16 %v585
        %v831 = vunpack.c.h.b16 %v585
        %v832 = vunpack.c.l.b16 %v586
        %v833 = vunpack.c.h.b16 %v586
        %v834 = vunpack.c.l.b16 %v587
        %v835 = vunpack.c.h.b16 %v587
        %v836 = vunpack.c.l.b16 %v588
        %v837 = vunpack.c.h.b16 %v588
        %v838 = vunpack.c.l.b16 %v589
        %v839 = vunpack.c.h.b16 %v589
        %v840 = vunpack.c.l.b16 %v590
        %v841 = vunpack.c.h.b16 %v590
        %v842 = vunpack.c.l.b16 %v591
        %v843 = vunpack.c.h.b16 %v591
        %v844 = vunpack.c.l.b16 %v592
        %v845 = vunpack.c.h.b16 %v592
        %v846 = vunpack.c.l.b16 %v593
        %v847 = vunpack.c.h.b16 %v593
        %v848 = vunpack.c.l.b16 %v594
        %v849 = vunpack.c.h.b16 %v594
        %v850 = vunpack.c.l.b16 %v595
        %v851 = vunpack.c.h.b16 %v595
        %v852 = vunpack.c.l.b16 %v596
        %v853 = vunpack.c.h.b16 %v596
        %v854 = vunpack.c.l.b16 %v597
        %v855 = vunpack.c.h.b16 %v597
        %v856 = vunpack.c.l.b16 %v598
        %v857 = vunpack.c.h.b16 %v598
        %v858 = vunpack.c.l.b16 %v599
        %v859 = vunpack.c.h.b16 %v599
        %v860 = vunpack.c.l.b16 %v600
        %v861 = vunpack.c.h.b16 %v600
        %v862 = vunpack.c.l.b16 %v601
        %v863 = vunpack.c.h.b16 %v601
        %v864 = vunpack.c.l.b16 %v602
        %v865 = vunpack.c.h.b16 %v602
        %v866 = vunpack.c.l.b16 %v603
        %v867 = vunpack.c.h.b16 %v603
        %v868 = vunpack.c.l.b16 %v604
        %v869 = vunpack.c.h.b16 %v604
        %v870 = vunpack.c.l.b16 %v605
        %v871 = vunpack.c.h.b16 %v605
        %v872 = vunpack.c.l.b16 %v606
        %v873 = vunpack.c.h.b16 %v606
        %v874 = vunpack.c.l.b16 %v607
        %v875 = vunpack.c.h.b16 %v607
        %v876 = vunpack.c.l.b16 %v608
        %v877 = vunpack.c.h.b16 %v608
        %v878 = vunpack.c.l.b16 %v609
        %v879 = vunpack.c.h.b16 %v609
        %v880 = vunpack.c.l.b16 %v610
        %v881 = vunpack.c.h.b16 %v610
        %v882 = vunpack.c.l.b16 %v611
        %v883 = vunpack.c.h.b16 %v611
        %v884 = vunpack.c.l.b16 %v612
        %v885 = vunpack.c.h.b16 %v612
        %v886 = vunpack.c.l.b16 %v613
        %v887 = vunpack.c.h.b16 %v613
        %v888 = vunpack.c.l.b16 %v614
        %v889 = vunpack.c.h.b16 %v614
        %v890 = vunpack.c.l.b16 %v615
        %v891 = vunpack.c.h.b16 %v615
        %v892 = vunpack.c.l.b16 %v616
        %v893 = vunpack.c.h.b16 %v616
        %v894 = vunpack.c.l.b16 %v617
        %v895 = vunpack.c.h.b16 %v617
        %v896 = vunpack.c.l.b16 %v618
        %v897 = vunpack.c.h.b16 %v618
        %v898 = vunpack.c.l.b16 %v619
        %v899 = vunpack.c.h.b16 %v619
        %v900 = vunpack.c.l.b16 %v620
        %v901 = vunpack.c.h.b16 %v620
        %v902 = vunpack.c.l.b16 %v621
        %v903 = vunpack.c.h.b16 %v621
        %v904 = vunpack.c.l.b16 %v622
        %v905 = vunpack.c.h.b16 %v622
        %v906 = vunpack.c.l.b16 %v623
        %v907 = vunpack.c.h.b16 %v623
        %v908 = vpack.c.b16 %v782, %v780
        %v909 = vpack.c.b16 %v783, %v781
        %v910 = vpack.c.b16 %v786, %v784
        %v911 = vpack.c.b16 %v787, %v785
        %v912 = vpack.c.b16 %v790, %v788
        %v913 = vpack.c.b16 %v791, %v789
        %v914 = vpack.c.b16 %v794, %v792
        %v915 = vpack.c.b16 %v795, %v793
        %v916 = vpack.c.b16 %v798, %v796
        %v917 = vpack.c.b16 %v799, %v797
        %v918 = vpack.c.b16 %v802, %v800
        %v919 = vpack.c.b16 %v803, %v801
        %v920 = vpack.c.b16 %v806, %v804
        %v921 = vpack.c.b16 %v807, %v805
        %v922 = vpack.c.b16 %v810, %v808
        %v923 = vpack.c.b16 %v811, %v809
        %v924 = vpack.c.b16 %v814, %v812
        %v925 = vpack.c.b16 %v815, %v813
        %v926 = vpack.c.b16 %v818, %v816
        %v927 = vpack.c.b16 %v819, %v817
        %v928 = vpack.c.b16 %v822, %v820
        %v929 = vpack.c.b16 %v823, %v821
        %v930 = vpack.c.b16 %v826, %v824
        %v931 = vpack.c.b16 %v827, %v825
        %v932 = vpack.c.b16 %v830, %v828
        %v933 = vpack.c.b16 %v831, %v829
        %v934 = vpack.c.b16 %v834, %v832
        %v935 = vpack.c.b16 %v835, %v833
        %v936 = vpack.c.b16 %v838, %v836
        %v937 = vpack.c.b16 %v839, %v837
        %v938 = vpack.c.b16 %v842, %v840
        %v939 = vpack.c.b16 %v843, %v841
        %v940 = vpack.c.b16 %v846, %v844
        %v941 = vpack.c.b16 %v847, %v845
        %v942 = vpack.c.b16 %v850, %v848
        %v943 = vpack.c.b16 %v851, %v849
        %v944 = vpack.c.b16 %v854, %v852
        %v945 = vpack.c.b16 %v855, %v853
        %v946 = vpack.c.b16 %v858, %v856
        %v947 = vpack.c.b16 %v859, %v857
        %v948 = vpack.c.b16 %v862, %v860
        %v949 = vpack.c.b16 %v863, %v861
        %v950 = vpack.c.b16 %v866, %v864
        %v951 = vpack.c.b16 %v867, %v865
        %v952 = vpack.c.b16 %v870, %v868
        %v953 = vpack.c.b16 %v871, %v869
        %v954 = vpack.c.b16 %v874, %v872
        %v955 = vpack.c.b16 %v875, %v873
        %v956 = vpack.c.b16 %v878, %v876
        %v957 = vpack.c.b16 %v879, %v877
        %v958 = vpack.c.b16 %v882, %v880
        %v959 = vpack.c.b16 %v883, %v881
        %v960 = vpack.c.b16 %v886, %v884
        %v961 = vpack.c.b16 %v887, %v885
        %v962 = vpack.c.b16 %v890, %v888
        %v963 = vpack.c.b16 %v891, %v889
        %v964 = vpack.c.b16 %v894, %v892
        %v965 = vpack.c.b16 %v895, %v893
        %v966 = vpack.c.b16 %v898, %v896
        %v967 = vpack.c.b16 %v899, %v897
        %v968 = vpack.c.b16 %v902, %v900
        %v969 = vpack.c.b16 %v903, %v901
        %v970 = vpack.c.b16 %v906, %v904
        %v971 = vpack.c.b16 %v907, %v905
        %1036 = vmatprep.subr.bf16.mxu0 %v909
        %1037 = vmatpush1.bf16.msra.mxu0 %v908
        %1038 = vmatprep.subr.bf16.mxu0 %v911
        %1039 = vmatpush1.bf16.msra.mxu0 %v910
        %1040 = vmatprep.subr.bf16.mxu0 %v913
        %1041 = vmatpush1.bf16.msra.mxu0 %v912
        %1042 = vmatprep.subr.bf16.mxu0 %v915
        %1043 = vmatpush1.bf16.msra.mxu0 %v914
        %1044 = vmatprep.subr.bf16.mxu0 %v917
        %1045 = vmatpush1.bf16.msra.mxu0 %v916
        %1046 = vmatprep.subr.bf16.mxu0 %v919
        %1047 = vmatpush1.bf16.msra.mxu0 %v918
        %1048 = vmatprep.subr.bf16.mxu0 %v921
        %1049 = vmatpush1.bf16.msra.mxu0 %v920
        %1050 = vmatprep.subr.bf16.mxu0 %v923
        %1051 = vmatpush1.bf16.msra.mxu0 %v922
        %1052 = vmatprep.subr.bf16.mxu0 %v925
        %1053 = vmatpush1.bf16.msra.mxu0 %v924
        %1054 = vmatprep.subr.bf16.mxu0 %v927
        %1055 = vmatpush1.bf16.msra.mxu0 %v926
        %1056 = vmatprep.subr.bf16.mxu0 %v929
        %1057 = vmatpush1.bf16.msra.mxu0 %v928
        %1058 = vmatprep.subr.bf16.mxu0 %v931
        %1059 = vmatpush1.bf16.msra.mxu0 %v930
        %1060 = vmatprep.subr.bf16.mxu0 %v933
        %1061 = vmatpush1.bf16.msra.mxu0 %v932
        %1062 = vmatprep.subr.bf16.mxu0 %v935
        %1063 = vmatpush1.bf16.msra.mxu0 %v934
        %1064 = vmatprep.subr.bf16.mxu0 %v937
        %1065 = vmatpush1.bf16.msra.mxu0 %v936
        %1066 = vmatprep.subr.bf16.mxu0 %v939
        %1067 = vmatpush1.bf16.msra.mxu0 %v938
        %1068 = vmatprep.mubr.bf16.mxu0 %v685
        %1069 = vmatmul.mubr.bf16.gmra.mrb[0].mxu0 %v684
        %v1070 = vpop.f32.mrb[0].mxu0
        %v1071 = vadd.f32 %v629, %v1070
        %v1072 = vpop.f32.mrb[0].mxu0
        %v1073 = vadd.f32 %v633, %v1072
        %v1074 = vpop.f32.mrb[0].mxu0
        %v1075 = vadd.f32 %v629, %v1074
        %v1076 = vpop.f32.mrb[0].mxu0
        %v1077 = vadd.f32 %v633, %v1076
        %1078 = vmatprep.mubr.bf16.mxu0 %v689
        %1079 = vmatmul.mubr.bf16.gmra.mrb[0].mxu0 %v688
        %v1080 = vpop.f32.mrb[0].mxu0
        %v1081 = vadd.f32 %v629, %v1080
        %v1082 = vpop.f32.mrb[0].mxu0
        %v1083 = vadd.f32 %v633, %v1082
        %v1084 = vpop.f32.mrb[0].mxu0
        %v1085 = vadd.f32 %v629, %v1084
        %v1086 = vpop.f32.mrb[0].mxu0
        %v1087 = vadd.f32 %v633, %v1086
        %1088 = vmatprep.mubr.bf16.mxu0 %v693
        %1089 = vmatmul.mubr.bf16.gmra.mrb[0].mxu0 %v692
        %v1090 = vpop.f32.mrb[0].mxu0
        %v1091 = vadd.f32 %v629, %v1090
        %v1092 = vpop.f32.mrb[0].mxu0
        %v1093 = vadd.f32 %v633, %v1092
        %v1094 = vpop.f32.mrb[0].mxu0
        %v1095 = vadd.f32 %v629, %v1094
        %v1096 = vpop.f32.mrb[0].mxu0
        %v1097 = vadd.f32 %v633, %v1096
        %1098 = vmatprep.mubr.bf16.mxu0 %v697
        %1099 = vmatmul.mubr.bf16.gmra.mrb[0].mxu0 %v696
        %v1100 = vpop.f32.mrb[0].mxu0
        %v1101 = vadd.f32 %v629, %v1100
        %v1102 = vpop.f32.mrb[0].mxu0
        %v1103 = vadd.f32 %v633, %v1102
        %v1104 = vpop.f32.mrb[0].mxu0
        %v1105 = vadd.f32 %v629, %v1104
        %v1106 = vpop.f32.mrb[0].mxu0
        %v1107 = vadd.f32 %v633, %v1106
        %1108 = vdwg.mxu0
        %1109 = vmatprep.subr.bf16.mxu0 %v941
        %1110 = vmatpush1.bf16.msra.mxu0 %v940
        %1111 = vmatprep.subr.bf16.mxu0 %v943
        %1112 = vmatpush1.bf16.msra.mxu0 %v942
        %1113 = vmatprep.subr.bf16.mxu0 %v945
        %1114 = vmatpush1.bf16.msra.mxu0 %v944
        %1115 = vmatprep.subr.bf16.mxu0 %v947
        %1116 = vmatpush1.bf16.msra.mxu0 %v946
        %1117 = vmatprep.subr.bf16.mxu0 %v949
        %1118 = vmatpush1.bf16.msra.mxu0 %v948
        %1119 = vmatprep.subr.bf16.mxu0 %v951
        %1120 = vmatpush1.bf16.msra.mxu0 %v950
        %1121 = vmatprep.subr.bf16.mxu0 %v953
        %1122 = vmatpush1.bf16.msra.mxu0 %v952
        %1123 = vmatprep.subr.bf16.mxu0 %v955
        %1124 = vmatpush1.bf16.msra.mxu0 %v954
        %1125 = vmatprep.subr.bf16.mxu0 %v957
        %1126 = vmatpush1.bf16.msra.mxu0 %v956
        %1127 = vmatprep.subr.bf16.mxu0 %v959
        %1128 = vmatpush1.bf16.msra.mxu0 %v958
        %1129 = vmatprep.subr.bf16.mxu0 %v961
        %1130 = vmatpush1.bf16.msra.mxu0 %v960
        %1131 = vmatprep.subr.bf16.mxu0 %v963
        %1132 = vmatpush1.bf16.msra.mxu0 %v962
        %1133 = vmatprep.subr.bf16.mxu0 %v965
        %1134 = vmatpush1.bf16.msra.mxu0 %v964
        %1135 = vmatprep.subr.bf16.mxu0 %v967
        %1136 = vmatpush1.bf16.msra.mxu0 %v966
        %1137 = vmatprep.subr.bf16.mxu0 %v969
        %1138 = vmatpush1.bf16.msra.mxu0 %v968
        %1139 = vmatprep.subr.bf16.mxu0 %v971
        %1140 = vmatpush1.bf16.msra.mxu0 %v970
        %1141 = vmatprep.mubr.bf16.mxu0 %v687
        %1142 = vmatmul.mubr.bf16.gmra.mrb[0].mxu0 %v686
        %v1143 = vpop.f32.mrb[0].mxu0
        %v1144 = vadd.f32 %v1071, %v1143
        %v1145 = vpop.f32.mrb[0].mxu0
        %v1146 = vadd.f32 %v1073, %v1145
        %v1147 = vpop.f32.mrb[0].mxu0
        %v1148 = vadd.f32 %v1075, %v1147
        %v1149 = vpop.f32.mrb[0].mxu0
        %v1150 = vadd.f32 %v1077, %v1149
        %1151 = vmatprep.mubr.bf16.mxu0 %v691
        %1152 = vmatmul.mubr.bf16.gmra.mrb[0].mxu0 %v690
        %v1153 = vpop.f32.mrb[0].mxu0
        %v1154 = vadd.f32 %v1081, %v1153
        %v1155 = vpop.f32.mrb[0].mxu0
        %v1156 = vadd.f32 %v1083, %v1155
        %v1157 = vpop.f32.mrb[0].mxu0
        %v1158 = vadd.f32 %v1085, %v1157
        %v1159 = vpop.f32.mrb[0].mxu0
        %v1160 = vadd.f32 %v1087, %v1159
        %1161 = vmatprep.mubr.bf16.mxu0 %v695
        %1162 = vmatmul.mubr.bf16.gmra.mrb[0].mxu0 %v694
        %v1163 = vpop.f32.mrb[0].mxu0
        %v1164 = vadd.f32 %v1091, %v1163
        %v1165 = vpop.f32.mrb[0].mxu0
        %v1166 = vadd.f32 %v1093, %v1165
        %v1167 = vpop.f32.mrb[0].mxu0
        %v1168 = vadd.f32 %v1095, %v1167
        %v1169 = vpop.f32.mrb[0].mxu0
        %v1170 = vadd.f32 %v1097, %v1169
        %1171 = vmatprep.mubr.bf16.mxu0 %v699
        %1172 = vmatmul.mubr.bf16.gmra.mrb[0].mxu0 %v698
        %v1173 = vpop.f32.mrb[0].mxu0
        %v1174 = vadd.f32 %v1101, %v1173
        %v1175 = vpop.f32.mrb[0].mxu0
        %v1176 = vadd.f32 %v1103, %v1175
        %v1177 = vpop.f32.mrb[0].mxu0
        %v1178 = vadd.f32 %v1105, %v1177
        %v1179 = vpop.f32.mrb[0].mxu0
        %v1180 = vadd.f32 %v1107, %v1179
        %1181 = vdwg.mxu0
        %v1182 = vmul.f32 %v1144, %v1144
        %v1183 = vmul.f32 %v1146, %v1146
        %v1184 = vmul.f32 %v1148, %v1148
        %v1185 = vmul.f32 %v1150, %v1150
        %v1186 = vmul.f32 %v1154, %v1154
        %v1187 = vmul.f32 %v1156, %v1156
        %v1188 = vmul.f32 %v1158, %v1158
        %v1189 = vmul.f32 %v1160, %v1160
        %v1190 = vmul.f32 %v1164, %v1164
        %v1191 = vmul.f32 %v1166, %v1166
        %v1192 = vmul.f32 %v1168, %v1168
        %v1193 = vmul.f32 %v1170, %v1170
        %v1194 = vmul.f32 %v1174, %v1174
        %v1195 = vmul.f32 %v1176, %v1176
        %v1196 = vmul.f32 %v1178, %v1178
        %v1197 = vmul.f32 %v1180, %v1180
        %v1198 = vpack.c.bf16 %v1184, %v1182
        %v1199 = vpack.c.bf16 %v1185, %v1183
        %v1200 = vpack.c.bf16 %v1188, %v1186
        %v1201 = vpack.c.bf16 %v1189, %v1187
        %v1202 = vpack.c.bf16 %v1192, %v1190
        %v1203 = vpack.c.bf16 %v1193, %v1191
        %v1204 = vpack.c.bf16 %v1196, %v1194
        %v1205 = vpack.c.bf16 %v1197, %v1195
        %v1206 = vld [vmem:[#allocation9] sm:$0xff]
        %v1207 = vld [vmem:[#allocation9 + $0x8] sm:$0xff]
        %v1208 = vld [vmem:[#allocation9 + $0x10] sm:$0xff]
        %v1209 = vld [vmem:[#allocation9 + $0x18] sm:$0xff]
        %v1210 = vld [vmem:[#allocation9 + $0x20] sm:$0xff]
        %v1211 = vld [vmem:[#allocation9 + $0x28] sm:$0xff]
        %v1212 = vld [vmem:[#allocation9 + $0x30] sm:$0xff]
        %v1213 = vld [vmem:[#allocation9 + $0x38] sm:$0xff]
        %v1214 = vld [vmem:[#allocation9 + $0x40] sm:$0xff]
        %v1215 = vld [vmem:[#allocation9 + $0x48] sm:$0xff]
        %v1216 = vld [vmem:[#allocation9 + $0x50] sm:$0xff]
        %v1217 = vld [vmem:[#allocation9 + $0x58] sm:$0xff]
        %v1218 = vld [vmem:[#allocation9 + $0x60] sm:$0xff]
        %v1219 = vld [vmem:[#allocation9 + $0x68] sm:$0xff]
        %v1220 = vld [vmem:[#allocation9 + $0x70] sm:$0xff]
        %v1221 = vld [vmem:[#allocation9 + $0x78] sm:$0xff]
        %v1222 = vld [vmem:[#allocation9 + $0x80] sm:$0xff]
        %v1223 = vld [vmem:[#allocation9 + $0x88] sm:$0xff]
        %v1224 = vld [vmem:[#allocation9 + $0x90] sm:$0xff]
        %v1225 = vld [vmem:[#allocation9 + $0x98] sm:$0xff]
        %v1226 = vld [vmem:[#allocation9 + $0xa0] sm:$0xff]
        %v1227 = vld [vmem:[#allocation9 + $0xa8] sm:$0xff]
        %v1228 = vld [vmem:[#allocation9 + $0xb0] sm:$0xff]
        %v1229 = vld [vmem:[#allocation9 + $0xb8] sm:$0xff]
        %v1230 = vld [vmem:[#allocation9 + $0xc0] sm:$0xff]
        %v1231 = vld [vmem:[#allocation9 + $0xc8] sm:$0xff]
        %v1232 = vld [vmem:[#allocation9 + $0xd0] sm:$0xff]
        %v1233 = vld [vmem:[#allocation9 + $0xd8] sm:$0xff]
        %v1234 = vld [vmem:[#allocation9 + $0xe0] sm:$0xff]
        %v1235 = vld [vmem:[#allocation9 + $0xe8] sm:$0xff]
        %v1236 = vld [vmem:[#allocation9 + $0xf0] sm:$0xff]
        %v1237 = vld [vmem:[#allocation9 + $0xf8] sm:$0xff]
        %v1238 = vld [vmem:[%s5] sm:$0x3]
        %v1240 = vlaneseq
        %v1241 = vshrl.u32 %v1240, 7
        %v1242 = vsub.s32 0, %v1241
        %v1243 = vrot.slane %v1238, %v1242
        %v1244 = vlaneseq
        %v1245 = vshrl.u32 %v1244, 7
        %v1246 = vsub.s32 1, %v1245
        %v1247 = vrot.slane %v1238, %v1246
        %v1282 = vunpack.c.l.b16 %v1206
        %v1283 = vunpack.c.h.b16 %v1206
        %v1284 = vunpack.c.l.b16 %v1207
        %v1285 = vunpack.c.h.b16 %v1207
        %v1286 = vunpack.c.l.b16 %v1208
        %v1287 = vunpack.c.h.b16 %v1208
        %v1288 = vunpack.c.l.b16 %v1209
        %v1289 = vunpack.c.h.b16 %v1209
        %v1290 = vunpack.c.l.b16 %v1210
        %v1291 = vunpack.c.h.b16 %v1210
        %v1292 = vunpack.c.l.b16 %v1211
        %v1293 = vunpack.c.h.b16 %v1211
        %v1294 = vunpack.c.l.b16 %v1212
        %v1295 = vunpack.c.h.b16 %v1212
        %v1296 = vunpack.c.l.b16 %v1213
        %v1297 = vunpack.c.h.b16 %v1213
        %v1298 = vunpack.c.l.b16 %v1214
        %v1299 = vunpack.c.h.b16 %v1214
        %v1300 = vunpack.c.l.b16 %v1215
        %v1301 = vunpack.c.h.b16 %v1215
        %v1302 = vunpack.c.l.b16 %v1216
        %v1303 = vunpack.c.h.b16 %v1216
        %v1304 = vunpack.c.l.b16 %v1217
        %v1305 = vunpack.c.h.b16 %v1217
        %v1306 = vunpack.c.l.b16 %v1218
        %v1307 = vunpack.c.h.b16 %v1218
        %v1308 = vunpack.c.l.b16 %v1219
        %v1309 = vunpack.c.h.b16 %v1219
        %v1310 = vunpack.c.l.b16 %v1220
        %v1311 = vunpack.c.h.b16 %v1220
        %v1312 = vunpack.c.l.b16 %v1221
        %v1313 = vunpack.c.h.b16 %v1221
        %v1314 = vunpack.c.l.b16 %v1222
        %v1315 = vunpack.c.h.b16 %v1222
        %v1316 = vunpack.c.l.b16 %v1223
        %v1317 = vunpack.c.h.b16 %v1223
        %v1318 = vunpack.c.l.b16 %v1224
        %v1319 = vunpack.c.h.b16 %v1224
        %v1320 = vunpack.c.l.b16 %v1225
        %v1321 = vunpack.c.h.b16 %v1225
        %v1322 = vunpack.c.l.b16 %v1226
        %v1323 = vunpack.c.h.b16 %v1226
        %v1324 = vunpack.c.l.b16 %v1227
        %v1325 = vunpack.c.h.b16 %v1227
        %v1326 = vunpack.c.l.b16 %v1228
        %v1327 = vunpack.c.h.b16 %v1228
        %v1328 = vunpack.c.l.b16 %v1229
        %v1329 = vunpack.c.h.b16 %v1229
        %v1330 = vunpack.c.l.b16 %v1230
        %v1331 = vunpack.c.h.b16 %v1230
        %v1332 = vunpack.c.l.b16 %v1231
        %v1333 = vunpack.c.h.b16 %v1231
        %v1334 = vunpack.c.l.b16 %v1232
        %v1335 = vunpack.c.h.b16 %v1232
        %v1336 = vunpack.c.l.b16 %v1233
        %v1337 = vunpack.c.h.b16 %v1233
        %v1338 = vunpack.c.l.b16 %v1234
        %v1339 = vunpack.c.h.b16 %v1234
        %v1340 = vunpack.c.l.b16 %v1235
        %v1341 = vunpack.c.h.b16 %v1235
        %v1342 = vunpack.c.l.b16 %v1236
        %v1343 = vunpack.c.h.b16 %v1236
        %v1344 = vunpack.c.l.b16 %v1237
        %v1345 = vunpack.c.h.b16 %v1237
        %v1346 = vpack.c.b16 %v1284, %v1282
        %v1347 = vpack.c.b16 %v1285, %v1283
        %v1348 = vpack.c.b16 %v1288, %v1286
        %v1349 = vpack.c.b16 %v1289, %v1287
        %v1350 = vpack.c.b16 %v1292, %v1290
        %v1351 = vpack.c.b16 %v1293, %v1291
        %v1352 = vpack.c.b16 %v1296, %v1294
        %v1353 = vpack.c.b16 %v1297, %v1295
        %v1354 = vpack.c.b16 %v1300, %v1298
        %v1355 = vpack.c.b16 %v1301, %v1299
        %v1356 = vpack.c.b16 %v1304, %v1302
        %v1357 = vpack.c.b16 %v1305, %v1303
        %v1358 = vpack.c.b16 %v1308, %v1306
        %v1359 = vpack.c.b16 %v1309, %v1307
        %v1360 = vpack.c.b16 %v1312, %v1310
        %v1361 = vpack.c.b16 %v1313, %v1311
        %v1362 = vpack.c.b16 %v1316, %v1314
        %v1363 = vpack.c.b16 %v1317, %v1315
        %v1364 = vpack.c.b16 %v1320, %v1318
        %v1365 = vpack.c.b16 %v1321, %v1319
        %v1366 = vpack.c.b16 %v1324, %v1322
        %v1367 = vpack.c.b16 %v1325, %v1323
        %v1368 = vpack.c.b16 %v1328, %v1326
        %v1369 = vpack.c.b16 %v1329, %v1327
        %v1370 = vpack.c.b16 %v1332, %v1330
        %v1371 = vpack.c.b16 %v1333, %v1331
        %v1372 = vpack.c.b16 %v1336, %v1334
        %v1373 = vpack.c.b16 %v1337, %v1335
        %v1374 = vpack.c.b16 %v1340, %v1338
        %v1375 = vpack.c.b16 %v1341, %v1339
        %v1376 = vpack.c.b16 %v1344, %v1342
        %v1377 = vpack.c.b16 %v1345, %v1343
        %1410 = vmatprep.subr.bf16.mxu0 %v1347
        %1411 = vmatpush1.bf16.msra.mxu0 %v1346
        %1412 = vmatprep.subr.bf16.mxu0 %v1349
        %1413 = vmatpush1.bf16.msra.mxu0 %v1348
        %1414 = vmatprep.subr.bf16.mxu0 %v1351
        %1415 = vmatpush1.bf16.msra.mxu0 %v1350
        %1416 = vmatprep.subr.bf16.mxu0 %v1353
        %1417 = vmatpush1.bf16.msra.mxu0 %v1352
        %1418 = vmatprep.subr.bf16.mxu0 %v1355
        %1419 = vmatpush1.bf16.msra.mxu0 %v1354
        %1420 = vmatprep.subr.bf16.mxu0 %v1357
        %1421 = vmatpush1.bf16.msra.mxu0 %v1356
        %1422 = vmatprep.subr.bf16.mxu0 %v1359
        %1423 = vmatpush1.bf16.msra.mxu0 %v1358
        %1424 = vmatprep.subr.bf16.mxu0 %v1361
        %1425 = vmatpush1.bf16.msra.mxu0 %v1360
        %1426 = vmatprep.subr.bf16.mxu0 %v1363
        %1427 = vmatpush1.bf16.msra.mxu0 %v1362
        %1428 = vmatprep.subr.bf16.mxu0 %v1365
        %1429 = vmatpush1.bf16.msra.mxu0 %v1364
        %1430 = vmatprep.subr.bf16.mxu0 %v1367
        %1431 = vmatpush1.bf16.msra.mxu0 %v1366
        %1432 = vmatprep.subr.bf16.mxu0 %v1369
        %1433 = vmatpush1.bf16.msra.mxu0 %v1368
        %1434 = vmatprep.subr.bf16.mxu0 %v1371
        %1435 = vmatpush1.bf16.msra.mxu0 %v1370
        %1436 = vmatprep.subr.bf16.mxu0 %v1373
        %1437 = vmatpush1.bf16.msra.mxu0 %v1372
        %1438 = vmatprep.subr.bf16.mxu0 %v1375
        %1439 = vmatpush1.bf16.msra.mxu0 %v1374
        %1440 = vmatprep.subr.bf16.mxu0 %v1377
        %1441 = vmatpush1.bf16.msra.mxu0 %v1376
        %1442 = vmatprep.mubr.bf16.mxu0 %v1199
        %1443 = vmatmul.mubr.bf16.gmra.mrb[0].mxu0 %v1198
        %v1444 = vpop.f32.mrb[0].mxu0
        %v1445 = vadd.f32 %v1243, %v1444
        %v1446 = vpop.f32.mrb[0].mxu0
        %v1447 = vadd.f32 %v1247, %v1446
        %v1448 = vpop.f32.mrb[0].mxu0
        %v1449 = vadd.f32 %v1243, %v1448
        %v1450 = vpop.f32.mrb[0].mxu0
        %v1451 = vadd.f32 %v1247, %v1450
        %1452 = vmatprep.mubr.bf16.mxu0 %v1201
        %1453 = vmatmul.mubr.bf16.gmra.mrb[0].mxu0 %v1200
        %v1454 = vpop.f32.mrb[0].mxu0
        %v1455 = vadd.f32 %v1243, %v1454
        %v1456 = vpop.f32.mrb[0].mxu0
        %v1457 = vadd.f32 %v1247, %v1456
        %v1458 = vpop.f32.mrb[0].mxu0
        %v1459 = vadd.f32 %v1243, %v1458
        %v1460 = vpop.f32.mrb[0].mxu0
        %v1461 = vadd.f32 %v1247, %v1460
        %1462 = vmatprep.mubr.bf16.mxu0 %v1203
        %1463 = vmatmul.mubr.bf16.gmra.mrb[0].mxu0 %v1202
        %v1464 = vpop.f32.mrb[0].mxu0
        %v1465 = vadd.f32 %v1243, %v1464
        %v1466 = vpop.f32.mrb[0].mxu0
        %v1467 = vadd.f32 %v1247, %v1466
        %v1468 = vpop.f32.mrb[0].mxu0
        %v1469 = vadd.f32 %v1243, %v1468
        %v1470 = vpop.f32.mrb[0].mxu0
        %v1471 = vadd.f32 %v1247, %v1470
        %1472 = vmatprep.mubr.bf16.mxu0 %v1205
        %1473 = vmatmul.mubr.bf16.gmra.mrb[0].mxu0 %v1204
        %v1474 = vpop.f32.mrb[0].mxu0
        %v1475 = vadd.f32 %v1243, %v1474
        %v1476 = vpop.f32.mrb[0].mxu0
        %v1477 = vadd.f32 %v1247, %v1476
        %v1478 = vpop.f32.mrb[0].mxu0
        %v1479 = vadd.f32 %v1243, %v1478
        %v1480 = vpop.f32.mrb[0].mxu0
        %v1481 = vadd.f32 %v1247, %v1480
        %1482 = vdwg.mxu0
        %v1483 = vrsqrt.pop %v1445
        %v1484 = vmul.f32 %v1445, %v1483
        %vm1485 = vcmp.eq.f32.partialorder %v1445, inf
        %v1486 = vsel %vm1485, %v1445, %v1484
        %vm1487 = vcmp.eq.f32.partialorder %v1445, 0.0
        %v1488 = vand.u32 %v1445, 2147483648
        %v1489 = vsel %vm1487, %v1488, %v1486
        %v1490 = vrsqrt.pop %v1447
        %v1491 = vmul.f32 %v1447, %v1490
        %vm1492 = vcmp.eq.f32.partialorder %v1447, inf
        %v1493 = vsel %vm1492, %v1447, %v1491
        %vm1494 = vcmp.eq.f32.partialorder %v1447, 0.0
        %v1495 = vand.u32 %v1447, 2147483648
        %v1496 = vsel %vm1494, %v1495, %v1493
        %v1497 = vrsqrt.pop %v1449
        %v1498 = vmul.f32 %v1449, %v1497
        %vm1499 = vcmp.eq.f32.partialorder %v1449, inf
        %v1500 = vsel %vm1499, %v1449, %v1498
        %vm1501 = vcmp.eq.f32.partialorder %v1449, 0.0
        %v1502 = vand.u32 %v1449, 2147483648
        %v1503 = vsel %vm1501, %v1502, %v1500
        %v1504 = vrsqrt.pop %v1451
        %v1505 = vmul.f32 %v1451, %v1504
        %vm1506 = vcmp.eq.f32.partialorder %v1451, inf
        %v1507 = vsel %vm1506, %v1451, %v1505
        %vm1508 = vcmp.eq.f32.partialorder %v1451, 0.0
        %v1509 = vand.u32 %v1451, 2147483648
        %v1510 = vsel %vm1508, %v1509, %v1507
        %v1511 = vrsqrt.pop %v1455
        %v1512 = vmul.f32 %v1455, %v1511
        %vm1513 = vcmp.eq.f32.partialorder %v1455, inf
        %v1514 = vsel %vm1513, %v1455, %v1512
        %vm1515 = vcmp.eq.f32.partialorder %v1455, 0.0
        %v1516 = vand.u32 %v1455, 2147483648
        %v1517 = vsel %vm1515, %v1516, %v1514
        %v1518 = vrsqrt.pop %v1457
        %v1519 = vmul.f32 %v1457, %v1518
        %vm1520 = vcmp.eq.f32.partialorder %v1457, inf
        %v1521 = vsel %vm1520, %v1457, %v1519
        %vm1522 = vcmp.eq.f32.partialorder %v1457, 0.0
        %v1523 = vand.u32 %v1457, 2147483648
        %v1524 = vsel %vm1522, %v1523, %v1521
        %v1525 = vrsqrt.pop %v1459
        %v1526 = vmul.f32 %v1459, %v1525
        %vm1527 = vcmp.eq.f32.partialorder %v1459, inf
        %v1528 = vsel %vm1527, %v1459, %v1526
        %vm1529 = vcmp.eq.f32.partialorder %v1459, 0.0
        %v1530 = vand.u32 %v1459, 2147483648
        %v1531 = vsel %vm1529, %v1530, %v1528
        %v1532 = vrsqrt.pop %v1461
        %v1533 = vmul.f32 %v1461, %v1532
        %vm1534 = vcmp.eq.f32.partialorder %v1461, inf
        %v1535 = vsel %vm1534, %v1461, %v1533
        %vm1536 = vcmp.eq.f32.partialorder %v1461, 0.0
        %v1537 = vand.u32 %v1461, 2147483648
        %v1538 = vsel %vm1536, %v1537, %v1535
        %v1539 = vrsqrt.pop %v1465
        %v1540 = vmul.f32 %v1465, %v1539
        %vm1541 = vcmp.eq.f32.partialorder %v1465, inf
        %v1542 = vsel %vm1541, %v1465, %v1540
        %vm1543 = vcmp.eq.f32.partialorder %v1465, 0.0
        %v1544 = vand.u32 %v1465, 2147483648
        %v1545 = vsel %vm1543, %v1544, %v1542
        %v1546 = vrsqrt.pop %v1467
        %v1547 = vmul.f32 %v1467, %v1546
        %vm1548 = vcmp.eq.f32.partialorder %v1467, inf
        %v1549 = vsel %vm1548, %v1467, %v1547
        %vm1550 = vcmp.eq.f32.partialorder %v1467, 0.0
        %v1551 = vand.u32 %v1467, 2147483648
        %v1552 = vsel %vm1550, %v1551, %v1549
        %v1553 = vrsqrt.pop %v1469
        %v1554 = vmul.f32 %v1469, %v1553
        %vm1555 = vcmp.eq.f32.partialorder %v1469, inf
        %v1556 = vsel %vm1555, %v1469, %v1554
        %vm1557 = vcmp.eq.f32.partialorder %v1469, 0.0
        %v1558 = vand.u32 %v1469, 2147483648
        %v1559 = vsel %vm1557, %v1558, %v1556
        %v1560 = vrsqrt.pop %v1471
        %v1561 = vmul.f32 %v1471, %v1560
        %vm1562 = vcmp.eq.f32.partialorder %v1471, inf
        %v1563 = vsel %vm1562, %v1471, %v1561
        %vm1564 = vcmp.eq.f32.partialorder %v1471, 0.0
        %v1565 = vand.u32 %v1471, 2147483648
        %v1566 = vsel %vm1564, %v1565, %v1563
        %v1567 = vrsqrt.pop %v1475
        %v1568 = vmul.f32 %v1475, %v1567
        %vm1569 = vcmp.eq.f32.partialorder %v1475, inf
        %v1570 = vsel %vm1569, %v1475, %v1568
        %vm1571 = vcmp.eq.f32.partialorder %v1475, 0.0
        %v1572 = vand.u32 %v1475, 2147483648
        %v1573 = vsel %vm1571, %v1572, %v1570
        %v1574 = vrsqrt.pop %v1477
        %v1575 = vmul.f32 %v1477, %v1574
        %vm1576 = vcmp.eq.f32.partialorder %v1477, inf
        %v1577 = vsel %vm1576, %v1477, %v1575
        %vm1578 = vcmp.eq.f32.partialorder %v1477, 0.0
        %v1579 = vand.u32 %v1477, 2147483648
        %v1580 = vsel %vm1578, %v1579, %v1577
        %v1581 = vrsqrt.pop %v1479
        %v1582 = vmul.f32 %v1479, %v1581
        %vm1583 = vcmp.eq.f32.partialorder %v1479, inf
        %v1584 = vsel %vm1583, %v1479, %v1582
        %vm1585 = vcmp.eq.f32.partialorder %v1479, 0.0
        %v1586 = vand.u32 %v1479, 2147483648
        %v1587 = vsel %vm1585, %v1586, %v1584
        %v1588 = vrsqrt.pop %v1481
        %v1589 = vmul.f32 %v1481, %v1588
        %vm1590 = vcmp.eq.f32.partialorder %v1481, inf
        %v1591 = vsel %vm1590, %v1481, %v1589
        %vm1592 = vcmp.eq.f32.partialorder %v1481, 0.0
        %v1593 = vand.u32 %v1481, 2147483648
        %v1594 = vsel %vm1592, %v1593, %v1591
        %v1595 = vmul.f32 %v1144, %v1489
        %v1596 = vmul.f32 %v1146, %v1496
        %v1597 = vmul.f32 %v1148, %v1503
        %v1598 = vmul.f32 %v1150, %v1510
        %v1599 = vmul.f32 %v1154, %v1517
        %v1600 = vmul.f32 %v1156, %v1524
        %v1601 = vmul.f32 %v1158, %v1531
        %v1602 = vmul.f32 %v1160, %v1538
        %v1603 = vmul.f32 %v1164, %v1545
        %v1604 = vmul.f32 %v1166, %v1552
        %v1605 = vmul.f32 %v1168, %v1559
        %v1606 = vmul.f32 %v1170, %v1566
        %v1607 = vmul.f32 %v1174, %v1573
        %v1608 = vmul.f32 %v1176, %v1580
        %v1609 = vmul.f32 %v1178, %v1587
        %v1610 = vmul.f32 %v1180, %v1594
        %s1611 = sld [smem:[#allocation2]]
        %vm1612 = vcmp.ge.f32.partialorder %v1595, 0.0
        %vm1613 = vcmp.ge.f32.partialorder %v1596, 0.0
        %vm1614 = vcmp.ge.f32.partialorder %v1597, 0.0
        %vm1615 = vcmp.ge.f32.partialorder %v1598, 0.0
        %vm1616 = vcmp.ge.f32.partialorder %v1599, 0.0
        %vm1617 = vcmp.ge.f32.partialorder %v1600, 0.0
        %vm1618 = vcmp.ge.f32.partialorder %v1601, 0.0
        %vm1619 = vcmp.ge.f32.partialorder %v1602, 0.0
        %vm1620 = vcmp.ge.f32.partialorder %v1603, 0.0
        %vm1621 = vcmp.ge.f32.partialorder %v1604, 0.0
        %vm1622 = vcmp.ge.f32.partialorder %v1605, 0.0
        %vm1623 = vcmp.ge.f32.partialorder %v1606, 0.0
        %vm1624 = vcmp.ge.f32.partialorder %v1607, 0.0
        %vm1625 = vcmp.ge.f32.partialorder %v1608, 0.0
        %vm1626 = vcmp.ge.f32.partialorder %v1609, 0.0
        %vm1627 = vcmp.ge.f32.partialorder %v1610, 0.0
        %v1628 = vstv %s1611
        %v1629 = vmul.f32 %v1628, %v1595
        %v1630 = vmul.f32 %v1628, %v1596
        %v1631 = vmul.f32 %v1628, %v1597
        %v1632 = vmul.f32 %v1628, %v1598
        %v1633 = vmul.f32 %v1628, %v1599
        %v1634 = vmul.f32 %v1628, %v1600
        %v1635 = vmul.f32 %v1628, %v1601
        %v1636 = vmul.f32 %v1628, %v1602
        %v1637 = vmul.f32 %v1628, %v1603
        %v1638 = vmul.f32 %v1628, %v1604
        %v1639 = vmul.f32 %v1628, %v1605
        %v1640 = vmul.f32 %v1628, %v1606
        %v1641 = vmul.f32 %v1628, %v1607
        %v1642 = vmul.f32 %v1628, %v1608
        %v1643 = vmul.f32 %v1628, %v1609
        %v1644 = vmul.f32 %v1628, %v1610
        %v1645 = vsel %vm1612, %v1595, %v1629
        %v1646 = vsel %vm1613, %v1596, %v1630
        %v1647 = vsel %vm1614, %v1597, %v1631
        %v1648 = vsel %vm1615, %v1598, %v1632
        %v1649 = vsel %vm1616, %v1599, %v1633
        %v1650 = vsel %vm1617, %v1600, %v1634
        %v1651 = vsel %vm1618, %v1601, %v1635
        %v1652 = vsel %vm1619, %v1602, %v1636
        %v1653 = vsel %vm1620, %v1603, %v1637
        %v1654 = vsel %vm1621, %v1604, %v1638
        %v1655 = vsel %vm1622, %v1605, %v1639
        %v1656 = vsel %vm1623, %v1606, %v1640
        %v1657 = vsel %vm1624, %v1607, %v1641
        %v1658 = vsel %vm1625, %v1608, %v1642
        %v1659 = vsel %vm1626, %v1609, %v1643
        %v1660 = vsel %vm1627, %v1610, %v1644
        %v1661 = vpack.c.bf16 %v1645, %v1645
        %v1662 = vpack.c.bf16 %v1646, %v1646
        %v1663 = vpack.c.bf16 %v1647, %v1647
        %v1664 = vpack.c.bf16 %v1648, %v1648
        %v1665 = vpack.c.bf16 %v1649, %v1649
        %v1666 = vpack.c.bf16 %v1650, %v1650
        %v1667 = vpack.c.bf16 %v1651, %v1651
        %v1668 = vpack.c.bf16 %v1652, %v1652
        %v1669 = vpack.c.bf16 %v1653, %v1653
        %v1670 = vpack.c.bf16 %v1654, %v1654
        %v1671 = vpack.c.bf16 %v1655, %v1655
        %v1672 = vpack.c.bf16 %v1656, %v1656
        %v1673 = vpack.c.bf16 %v1657, %v1657
        %v1674 = vpack.c.bf16 %v1658, %v1658
        %v1675 = vpack.c.bf16 %v1659, %v1659
        %v1676 = vpack.c.bf16 %v1660, %v1660
        %v1693 = vunpack.c.l.b16 %v1661
        %v1694 = vunpack.c.l.b16 %v1662
        %v1695 = vunpack.c.l.b16 %v1663
        %v1696 = vunpack.c.l.b16 %v1664
        %v1697 = vunpack.c.l.b16 %v1665
        %v1698 = vunpack.c.l.b16 %v1666
        %v1699 = vunpack.c.l.b16 %v1667
        %v1700 = vunpack.c.l.b16 %v1668
        %v1701 = vunpack.c.l.b16 %v1669
        %v1702 = vunpack.c.l.b16 %v1670
        %v1703 = vunpack.c.l.b16 %v1671
        %v1704 = vunpack.c.l.b16 %v1672
        %v1705 = vunpack.c.l.b16 %v1673
        %v1706 = vunpack.c.l.b16 %v1674
        %v1707 = vunpack.c.l.b16 %v1675
        %v1708 = vunpack.c.l.b16 %v1676
        %v1709 = vpack.c.b16 %v1694, %v1693
        %v1710 = vpack.c.b16 %v1696, %v1695
        %v1711 = vpack.c.b16 %v1698, %v1697
        %v1712 = vpack.c.b16 %v1700, %v1699
        %v1713 = vpack.c.b16 %v1702, %v1701
        %v1714 = vpack.c.b16 %v1704, %v1703
        %v1715 = vpack.c.b16 %v1706, %v1705
        %v1716 = vpack.c.b16 %v1708, %v1707
        %1725 = vst [vmem:[%s444] sm:$0xff] %v1709
        %1726 = vst [vmem:[%s444 + $0x8] sm:$0xff] %v1710
        %1727 = vst [vmem:[%s444 + $0x10] sm:$0xff] %v1711
        %1728 = vst [vmem:[%s444 + $0x18] sm:$0xff] %v1712
        %1729 = vst [vmem:[%s444 + $0x20] sm:$0xff] %v1713
        %1730 = vst [vmem:[%s444 + $0x28] sm:$0xff] %v1714
        %1731 = vst [vmem:[%s444 + $0x30] sm:$0xff] %v1715
        %1732 = vst [vmem:[%s444 + $0x38] sm:$0xff] %v1716
        %v1733 = vadd.f32 %v1645, %v1647
        %v1734 = vadd.f32 %v1733, %v1649
        %v1735 = vadd.f32 %v1734, %v1651
        %v1736 = vadd.f32 %v1735, %v1653
        %v1737 = vadd.f32 %v1736, %v1655
        %v1738 = vadd.f32 %v1737, %v1657
        %v1739 = vadd.f32 %v1738, %v1659
        %v1740 = vrot.slane %v1739, 4
        %v1741 = vadd.f32 %v1739, %v1740
        %v1742 = vrot.slane %v1741, 2
        %v1743 = vadd.f32 %v1741, %v1742
        %v1744 = vrot.slane %v1743, 1
        %v1745 = vadd.f32 %v1743, %v1744
        %v1746 = vadd.f32 %v1646, %v1648
        %v1747 = vadd.f32 %v1746, %v1650
        %v1748 = vadd.f32 %v1747, %v1652
        %v1749 = vadd.f32 %v1748, %v1654
        %v1750 = vadd.f32 %v1749, %v1656
        %v1751 = vadd.f32 %v1750, %v1658
        %v1752 = vadd.f32 %v1751, %v1660
        %v1753 = vrot.slane %v1752, 4
        %v1754 = vadd.f32 %v1752, %v1753
        %v1755 = vrot.slane %v1754, 2
        %v1756 = vadd.f32 %v1754, %v1755
        %v1757 = vrot.slane %v1756, 1
        %v1758 = vadd.f32 %v1756, %v1757
        %1759 = vst [vmem:[%s451] sm:$0xff] %v1745
        %1760 = vst [vmem:[%s451 + $0x8] sm:$0xff] %v1758
        %s1761 = sand.u32 %s238, 1
        %s1762 = scalar_lea.sflag [#allocation5], %s1761
        %s1763 = sand.u32 %s238, 1
        %s1764 = smul.addr %s1763, 64
        %s1765 = scalar_lea.vmem [#allocation11], %s1764
        %s1766 = sand.u32 %s270, 1
        %s1767 = scalar_lea.sflag [#allocation13], %s1766
        %s1768 = sand.u32 %s270, 1
        %s1769 = smul.addr %s1768, 16
        %s1770 = scalar_lea.vmem [#allocation12], %s1769
        // Predicated region
        $region65: #{tpu_custom_call.1} parent=47 // pred_check
          %p1771 = pneg %p248
        $region66: #{tpu_custom_call.1} parent=47 // pred_check_branch
          %1773 = sbr.rel (%p1771) target = $region68
        $region67: #{tpu_custom_call.1} parent=47 // pred_region
          %s1774 = sadd.s32 %s40, %s43
          %s1775 = smul.u32 8, %s1774
          %s1776 = smul.u32 2, %s42
          %s1778 = ssub.s32 1024, 1024
          %1779 = vsyncadd %s1762, %s1778
          %s1780 = smul.addr %s41, 2
          %s1781 = sadd.s32 %s1776, %s1780
          %s1782 = smul.addr %s1775, 2
          %s1783 = sadd.s32 %s1781, %s1782
          %s1784 = smul.addr %s1783, 64
          %s1785 = scalar_lea.hbm %s7, %s1784
          %s1786 = sshll.u32 %s1765, 4
          %s1787 = int_to_ptr.vmem [resolvable:$true] %s1786
          %1792 = dma.vmem_to_hbm [thread:$0]  %s1787, 1024, %s1785, %s1762, 128, 128, 8
        $region68: #{tpu_custom_call.1} parent=47 // pred_fallthru
          _
        // Predicated region
        $region69: #{tpu_custom_call.1} parent=47 // pred_check
          %p1793 = pneg %p280
        $region70: #{tpu_custom_call.1} parent=47 // pred_check_branch
          %1795 = sbr.rel (%p1793) target = $region72
        $region71: #{tpu_custom_call.1} parent=47 // pred_region
          %s1796 = sadd.s32 %s41, %s42
          %s1797 = sadd.s32 %s1796, %s43
          %s1799 = ssub.s32 256, 256
          %1800 = vsyncadd %s1767, %s1799
          %s1801 = smul.addr %s1797, 2
          %s1802 = smul.addr %s40, 2
          %s1803 = sadd.s32 %s1801, %s1802
          %s1804 = smul.addr %s1803, 128
          %s1805 = scalar_lea.hbm %s8, %s1804
          %s1807 = sshll.u32 %s1770, 4
          %s1808 = int_to_ptr.vmem [resolvable:$true] %s1807
          %1810 = dma.vmem_to_hbm [thread:$0]  %s1808, 256, %s1805, %s1767
        $region72: #{tpu_custom_call.1} parent=47 // pred_fallthru
          _
      $region48: #{tpu_custom_call.1} parent=5 // pred_fallthru
        _
      %p1811 = scmp.le.s32.totalorder 2, %s29
      // Predicated region
      $region73: #{tpu_custom_call.1} parent=5 // pred_check
        %p1812 = pneg %p1811
      $region74: #{tpu_custom_call.1} parent=5 // pred_check_branch
        %1814 = sbr.rel (%p1812) target = $region76
      $region75: #{tpu_custom_call.1} parent=5 // pred_region
        %s1815 = ssub.s32 %s29, 2
        // Predicated region
        $region77: #{tpu_custom_call.1} parent=75 // pred_check
          %p1816 = pneg %p254
        $region78: #{tpu_custom_call.1} parent=75 // pred_check_branch
          %1818 = sbr.rel (%p1816) target = $region80
        $region79: #{tpu_custom_call.1} parent=75 // pred_region
          %s1819 = sand.u32 %s239, 1
          %s1820 = scalar_lea.sflag [#allocation5], %s1819
          %s1821 = sand.u32 %s239, 1
          %s1822 = smul.addr %s1821, 64
          %s1823 = scalar_lea.vmem [#allocation11], %s1822
          %1824 = dma.done %s1820, 1024
        $region80: #{tpu_custom_call.1} parent=75 // pred_fallthru
          _
        // Predicated region
        $region81: #{tpu_custom_call.1} parent=75 // pred_check
          %p1825 = pneg %p286
        $region82: #{tpu_custom_call.1} parent=75 // pred_check_branch
          %1827 = sbr.rel (%p1825) target = $region84
        $region83: #{tpu_custom_call.1} parent=75 // pred_region
          %s1828 = sand.u32 %s271, 1
          %s1829 = scalar_lea.sflag [#allocation13], %s1828
          %s1830 = sand.u32 %s271, 1
          %s1831 = smul.addr %s1830, 16
          %s1832 = scalar_lea.vmem [#allocation12], %s1831
          %1833 = dma.done %s1829, 256
        $region84: #{tpu_custom_call.1} parent=75 // pred_fallthru
          _
      $region76: #{tpu_custom_call.1} parent=5 // pred_fallthru
        _
    $region6: #{tpu_custom_call.1} parent=1 // loop_footer
      %s33 = sadd.s32 1, %s29
    $region7: #{tpu_custom_call.1} parent=1 // loop_footer_branch
      %28 = sbr.rel target = $region3
    $region8: #{tpu_custom_call.1} parent=1 // loop_exit
      _
    %1834 = vsyncpa [#allocation4], 1
    %s1835 = scalar_lea.sflag [#allocation4], 1
    %1836 = vsyncpa %s1835, 1
    %1837 = vsyncpa [#allocation7], 1
    %s1838 = scalar_lea.sflag [#allocation7], 1
    %1839 = vsyncpa %s1838, 1
    %1840 = vsyncpa [#allocation10], 1
    %1841 = vsyncpa [#allocation5], 1
    %s1842 = scalar_lea.sflag [#allocation5], 1
    %1843 = vsyncpa %s1842, 1
    %1844 = vsyncpa [#allocation13], 1
    %s1845 = scalar_lea.sflag [#allocation13], 1
    %1846 = vsyncpa %s1845, 1

</llo_original>
